<compile_context>
chip_gen: v6e
topology: v6e:2x2x1
jax: 0.10.0
libtpu: 0.0.40
codegen_flags: <defaults>
</compile_context>

<pallas_src>
import functools

import jax
import jax.numpy as jnp
from jax.experimental import pallas as pl
from jax.experimental.pallas import tpu as pltpu

HIDDEN = 768
LN_EPS = 1e-5  # PyTorch nn.LayerNorm default


# ---------------------------------------------------------------------------
# Fused Pallas kernel:
#   patch-embed (MXU) -> LayerNorm -> token-mean pool -> Linear(768, C_pad)
# ---------------------------------------------------------------------------
def smit_fused_kernel(patches_ref, w_pe_ref, gamma_ref, beta_ref,
                      fc_w_ref, fc_b_ref, out_ref, acc_ref, *, inv_n):
    # patches_ref: (1, TN, P) bf16     w_pe_ref: (P, 768) bf16
    # gamma/beta : (1, 768)  f32       fc_w_ref: (768, C_pad) f32
    # fc_b_ref   : (1, C_pad) f32      out_ref : (1, 1, C_pad) f32
    # acc_ref    : (1, 768)  f32 scratch (token-sum of normalized activations)
    j = pl.program_id(1)

    @pl.when(j == 0)
    def _init():
        acc_ref[...] = jnp.zeros_like(acc_ref)

    # Patch embedding on the MXU with f32 accumulation: (TN, P) @ (P, 768).
    x = jnp.dot(patches_ref[0], w_pe_ref[...],
                preferred_element_type=jnp.float32)            # (TN, 768) f32

    # LayerNorm statistics over the hidden axis (biased variance, like torch).
    # gamma/beta are applied in the finalize branch (linear in the token mean).
    mu = jnp.mean(x, axis=-1, keepdims=True)                   # (TN, 1)
    xc = x - mu
    var = jnp.mean(xc * xc, axis=-1, keepdims=True)            # (TN, 1)
    xn = xc * jax.lax.rsqrt(var + LN_EPS)                      # (TN, 768)

    # Accumulate the token-sum of the normalized activations.
    acc_ref[...] += jnp.sum(xn, axis=0, keepdims=True)         # (1, 768)

    @pl.when(j == pl.num_programs(1) - 1)
    def _finalize():
        # mean over tokens, LN affine params, then the final FC (MXU).
        pooled = gamma_ref[...] * (acc_ref[...] * inv_n) + beta_ref[...]
        logits = jnp.dot(pooled, fc_w_ref[...],
                         preferred_element_type=jnp.float32) + fc_b_ref[...]
        out_ref[...] = logits.reshape(out_ref.shape).astype(out_ref.dtype)


def _pick_token_tile(n, max_tile=512):
    """Largest multiple-of-8 divisor of n that is <= max_tile (or n itself)."""
    if n <= max_tile:
        return n
    for t in range(max_tile, 7, -8):
        if n % t == 0:
            return t
    return n  # fallback: single tile


def smit_fused_head(patches, w_pe, gamma, beta, fc_w, fc_b, *, token_tile=None):
    """patches: (B, N, P) bf16, w_pe: (P, 768) bf16 -> logits (B, n_classes)."""
    B, N, P = patches.shape
    H = w_pe.shape[1]
    assert H == HIDDEN
    n_classes = fc_w.shape[1]
    c_pad = max(128, ((n_classes + 127) // 128) * 128)  # lane-dense output

    tn = token_tile if token_tile is not None else _pick_token_tile(N)
    assert N % tn == 0, f"token tile {tn} must divide N={N}"
    assert tn % 8 == 0 or tn == N, f"token tile {tn} must be a multiple of 8"
    n_tiles = N // tn

    gamma2d = gamma.reshape(1, H).astype(jnp.float32)
    beta2d = beta.reshape(1, H).astype(jnp.float32)
    fc_w_pad = jnp.zeros((H, c_pad), jnp.float32)
    fc_w_pad = fc_w_pad.at[:, :n_classes].set(fc_w.astype(jnp.float32))
    fc_b_pad = jnp.zeros((1, c_pad), jnp.float32)
    fc_b_pad = fc_b_pad.at[:, :n_classes].set(
        fc_b.reshape(1, n_classes).astype(jnp.float32))

    kernel = functools.partial(smit_fused_kernel, inv_n=1.0 / float(N))

    out = pl.pallas_call(
        kernel,
        grid=(B, n_tiles),
        in_specs=[
            pl.BlockSpec((1, tn, P), lambda b, j: (b, j, 0)),   # patch slab
            pl.BlockSpec((P, H), lambda b, j: (0, 0)),          # patch-embed W
            pl.BlockSpec((1, H), lambda b, j: (0, 0)),          # gamma
            pl.BlockSpec((1, H), lambda b, j: (0, 0)),          # beta
            pl.BlockSpec((H, c_pad), lambda b, j: (0, 0)),      # fc W (padded)
            pl.BlockSpec((1, c_pad), lambda b, j: (0, 0)),      # fc b (padded)
        ],
        out_specs=pl.BlockSpec((1, 1, c_pad), lambda b, j: (b, 0, 0)),
        out_shape=jax.ShapeDtypeStruct((B, 1, c_pad), jnp.float32),
        scratch_shapes=[pltpu.VMEM((1, HIDDEN), jnp.float32)],
        compiler_params=pltpu.CompilerParams(
            dimension_semantics=("parallel", "arbitrary"),
            vmem_limit_bytes=64 << 20),
    )(patches, w_pe, gamma2d, beta2d, fc_w_pad, fc_b_pad)

    return out.reshape(B, c_pad)[:, :n_classes]


# ---------------------------------------------------------------------------
# Plain-JAX glue: preprocessing + patch extraction (encoder stand-in input)
# ---------------------------------------------------------------------------
def preprocess(x, interpolate):
    # x: (B, C, D, H, W) in NCDHW, matching PyTorch.
    if interpolate:
        B, C, _, _, _ = x.shape
        # nnf.interpolate(..., size=(96,96,96), mode='trilinear')
        return jax.image.resize(x, (B, C, 96, 96, 96), method="trilinear")
    # nnf.pad(x, (2,2,2,2,2,2)): pad the last three dims by 2 on each side.
    return jnp.pad(x, ((0, 0), (0, 0), (2, 2), (2, 2), (2, 2)))


def extract_patches(x, patch):
    """(B, C, D, H, W) -> (B, N, C*p^3) non-overlapping cubic patches."""
    B, C, D, H, W = x.shape
    p = patch
    assert D % p == 0 and H % p == 0 and W % p == 0
    x = x.reshape(B, C, D // p, p, H // p, p, W // p, p)
    x = jnp.transpose(x, (0, 2, 4, 6, 1, 3, 5, 7))
    n_tokens = (D // p) * (H // p) * (W // p)
    return x.reshape(B, n_tokens, C * p * p * p)


@functools.partial(jax.jit,
                   static_argnames=("interpolate", "patch", "token_tile"))
def smit_classifier_forward(x, params, interpolate=False, patch=8,
                            token_tile=None):
    x = preprocess(x, interpolate)
    # bf16 in HBM (halves streamed bytes); kernel computes statistics in f32.
    patches = extract_patches(x, patch).astype(jnp.bfloat16)
    w_pe = params["patch_embed_w"].astype(jnp.bfloat16)
    return smit_fused_head(patches, w_pe,
                           params["ln_gamma"], params["ln_beta"],
                           params["fc_w"], params["fc_b"],
                           token_tile=token_tile)


# ---------------------------------------------------------------------------
# Pure-JAX reference (same bf16 quantization of the stand-in encoder inputs)
# ---------------------------------------------------------------------------
def reference_forward(x, params, interpolate, patch):
    x = preprocess(x, interpolate)
    patches = extract_patches(x, patch).astype(jnp.bfloat16).astype(jnp.float32)
    w_pe = params["patch_embed_w"].astype(jnp.bfloat16).astype(jnp.float32)
    tok = jnp.einsum("bnp,ph->bnh", patches, w_pe,
                     precision=jax.lax.Precision.HIGHEST)
    mu = jnp.mean(tok, axis=-1, keepdims=True)
    var = jnp.mean((tok - mu) ** 2, axis=-1, keepdims=True)
    y = (tok - mu) * jax.lax.rsqrt(var + LN_EPS) * params["ln_gamma"] \
        + params["ln_beta"]
    pooled = jnp.mean(y, axis=1)
    return pooled @ params["fc_w"] + params["fc_b"]


if __name__ == "__main__":
    key = jax.random.PRNGKey(0)
    k_x1, k_x2, k_pe, k_g, k_b, k_w, k_fb = jax.random.split(key, 7)

    patch = 8
    n_classes = 4
    C = 1
    patch_dim = C * patch ** 3  # 512

    params = {
        "patch_embed_w": 0.02 * jax.random.normal(
            k_pe, (patch_dim, HIDDEN), dtype=jnp.float32),
        "ln_gamma": 1.0 + 0.1 * jax.random.normal(
            k_g, (HIDDEN,), dtype=jnp.float32),
        "ln_beta": 0.1 * jax.random.normal(k_b, (HIDDEN,), dtype=jnp.float32),
        "fc_w": 0.05 * jax.random.normal(
            k_w, (HIDDEN, n_classes), dtype=jnp.float32),
        "fc_b": 0.01 * jax.random.normal(
            k_fb, (n_classes,), dtype=jnp.float32),
    }

    # --- Test 1: single token tile. 12^3 volume -> pad -> 16^3, N=8 tokens.
    B, S = 2, 12
    x1 = jax.random.normal(k_x1, (B, C, S, S, S), dtype=jnp.float32)
    logits1 = smit_classifier_forward(x1, params, interpolate=False,
                                      patch=patch)
    logits1 = jax.block_until_ready(logits1)
    ref1 = reference_forward(x1, params, False, patch)
    assert logits1.shape == (B, n_classes)
    assert bool(jnp.allclose(logits1, ref1, atol=3e-3, rtol=3e-3)), (
        float(jnp.max(jnp.abs(logits1 - ref1))))

    # --- Test 2: multi-tile token axis. 28^3 -> pad -> 32^3, N=64 tokens,
    #             token_tile=16 -> grid (B, 4), exercises the accumulator path.
    B2, S2 = 2, 28
    x2 = jax.random.normal(k_x2, (B2, C, S2, S2, S2), dtype=jnp.float32)
    logits2 = smit_classifier_forward(x2, params, interpolate=False,
                                      patch=patch, token_tile=16)
    logits2 = jax.block_until_ready(logits2)
    ref2 = reference_forward(x2, params, False, patch)
    assert logits2.shape == (B2, n_classes)
    assert bool(jnp.allclose(logits2, ref2, atol=3e-3, rtol=3e-3)), (
        float(jnp.max(jnp.abs(logits2 - ref2))))

    print("KERNEL_OK")
</pallas_src>

<mosaic_0001>
module attributes {stable_mosaic.version = 11 : i64} {
  func.func @smit_fused_kernel(%arg0: i32, %arg1: i32, %arg2: memref<1x8x512xbf16, #tpu.memory_space<vmem>>, %arg3: memref<512x768xbf16, #tpu.memory_space<vmem>>, %arg4: memref<1x768xf32, #tpu.memory_space<vmem>>, %arg5: memref<1x768xf32, #tpu.memory_space<vmem>>, %arg6: memref<768x128xf32, #tpu.memory_space<vmem>>, %arg7: memref<1x128xf32, #tpu.memory_space<vmem>>, %arg8: memref<1x1x128xf32, #tpu.memory_space<vmem>>, %arg9: memref<1x768xf32, #tpu.memory_space<vmem>>) attributes {dimension_semantics = [#tpu.dimension_semantics<parallel>, #tpu.dimension_semantics<arbitrary>], iteration_bounds = array<i64: 2, 1>, scalar_prefetch = 0 : i64, scratch_operands = 1 : i64, tpu.core_type = #tpu.core_type<tc>, window_params = [{transform_indices = @transform_0, window_bounds = array<i64: 1, 8, 512>}, {pipeline_mode = #tpu.pipeline_mode<synchronous>, transform_indices = @transform_1, window_bounds = array<i64: 512, 768>}, {pipeline_mode = #tpu.pipeline_mode<synchronous>, transform_indices = @transform_2, window_bounds = array<i64: 1, 768>}, {pipeline_mode = #tpu.pipeline_mode<synchronous>, transform_indices = @transform_3, window_bounds = array<i64: 1, 768>}, {pipeline_mode = #tpu.pipeline_mode<synchronous>, transform_indices = @transform_4, window_bounds = array<i64: 768, 128>}, {pipeline_mode = #tpu.pipeline_mode<synchronous>, transform_indices = @transform_5, window_bounds = array<i64: 1, 128>}, {transform_indices = @transform_6, window_bounds = array<i64: 1, 1, 128>}]} {
    %c0_i32 = arith.constant 0 : i32
    %0 = arith.cmpi eq, %arg1, %c0_i32 : i32
    %1 = arith.extui %0 : i1 to i32
    %c0_i32_0 = arith.constant 0 : i32
    %2 = arith.cmpi ne, %1, %c0_i32_0 : i32
    scf.if %2 {
      %cst_17 = arith.constant 0.000000e+00 : f32
      %31 = vector.broadcast %cst_17 : f32 to vector<1x768xf32>
      %c0_18 = arith.constant 0 : index
      %c0_19 = arith.constant 0 : index
      %32 = vector.load %arg9[%c0_18, %c0_19] : memref<1x768xf32, #tpu.memory_space<vmem>>, vector<1x768xf32>
      tpu.vector_store %arg9[%c0_18, %c0_19], %31 {strides = array<i32>} : memref<1x768xf32, #tpu.memory_space<vmem>>, vector<1x768xf32>,
    } else {
    }
    %c0 = arith.constant 0 : index
    %c0_1 = arith.constant 0 : index
    %c0_2 = arith.constant 0 : index
    %3 = vector.load %arg2[%c0, %c0_1, %c0_2] : memref<1x8x512xbf16, #tpu.memory_space<vmem>>, vector<1x8x512xbf16>
    %4 = vector.shape_cast %3 : vector<1x8x512xbf16> to vector<8x512xbf16>
    %c0_3 = arith.constant 0 : index
    %c0_4 = arith.constant 0 : index
    %5 = vector.load %arg3[%c0_3, %c0_4] : memref<512x768xbf16, #tpu.memory_space<vmem>>, vector<512x768xbf16>
    %cst = arith.constant dense<0.000000e+00> : vector<8x768xf32>
    %6 = tpu.matmul %4, %5, %cst {dimension_numbers = #tpu.dot_dimension_numbers<[1], [0], [0], [1], [0, 0, 1, 1], [], []>} : vector<8x512xbf16>, vector<512x768xbf16>, vector<8x768xf32> -> vector<8x768xf32>
    %cst_5 = arith.constant dense<0.000000e+00> : vector<8xf32>
    %7 = vector.multi_reduction <add>, %6, %cst_5 [1] : vector<8x768xf32> to vector<8xf32>
    %8 = vector.shape_cast %7 : vector<8xf32> to vector<8x1xf32>
    %cst_6 = arith.constant 7.680000e+02 : f32
    %9 = vector.broadcast %cst_6 : f32 to vector<8x1xf32>
    %10 = arith.divf %8, %9 : vector<8x1xf32>
    %11 = vector.broadcast %10 : vector<8x1xf32> to vector<8x768xf32>
    %12 = arith.subf %6, %11 : vector<8x768xf32>
    %13 = arith.mulf %12, %12 : vector<8x768xf32>
    %cst_7 = arith.constant dense<0.000000e+00> : vector<8xf32>
    %14 = vector.multi_reduction <add>, %13, %cst_7 [1] : vector<8x768xf32> to vector<8xf32>
    %15 = vector.shape_cast %14 : vector<8xf32> to vector<8x1xf32>
    %cst_8 = arith.constant 7.680000e+02 : f32
    %16 = vector.broadcast %cst_8 : f32 to vector<8x1xf32>
    %17 = arith.divf %15, %16 : vector<8x1xf32>
    %cst_9 = arith.constant 9.99999974E-6 : f32
    %18 = vector.broadcast %cst_9 : f32 to vector<8x1xf32>
    %19 = arith.addf %17, %18 : vector<8x1xf32>
    %20 = math.rsqrt %19 : vector<8x1xf32>
    %21 = vector.broadcast %20 : vector<8x1xf32> to vector<8x768xf32>
    %22 = arith.mulf %12, %21 : vector<8x768xf32>
    %c0_10 = arith.constant 0 : index
    %c0_11 = arith.constant 0 : index
    %23 = vector.load %arg9[%c0_10, %c0_11] : memref<1x768xf32, #tpu.memory_space<vmem>>, vector<1x768xf32>
    %cst_12 = arith.constant dense<0.000000e+00> : vector<768xf32>
    %24 = vector.multi_reduction <add>, %22, %cst_12 [0] : vector<8x768xf32> to vector<768xf32>
    %25 = vector.shape_cast %24 : vector<768xf32> to vector<1x768xf32>
    %26 = arith.addf %23, %25 : vector<1x768xf32>
    %c0_13 = arith.constant 0 : index
    %c0_14 = arith.constant 0 : index
    %27 = vector.load %arg9[%c0_13, %c0_14] : memref<1x768xf32, #tpu.memory_space<vmem>>, vector<1x768xf32>
    tpu.vector_store %arg9[%c0_13, %c0_14], %26 {strides = array<i32>} : memref<1x768xf32, #tpu.memory_space<vmem>>, vector<1x768xf32>,
    %c0_i32_15 = arith.constant 0 : i32
    %28 = arith.cmpi eq, %arg1, %c0_i32_15 : i32
    %29 = arith.extui %28 : i1 to i32
    %c0_i32_16 = arith.constant 0 : i32
    %30 = arith.cmpi ne, %29, %c0_i32_16 : i32
    scf.if %30 {
      %c0_17 = arith.constant 0 : index
      %c0_18 = arith.constant 0 : index
      %31 = vector.load %arg4[%c0_17, %c0_18] : memref<1x768xf32, #tpu.memory_space<vmem>>, vector<1x768xf32>
      %c0_19 = arith.constant 0 : index
      %c0_20 = arith.constant 0 : index
      %32 = vector.load %arg9[%c0_19, %c0_20] : memref<1x768xf32, #tpu.memory_space<vmem>>, vector<1x768xf32>
      %cst_21 = arith.constant 1.250000e-01 : f32
      %33 = vector.broadcast %cst_21 : f32 to vector<1x768xf32>
      %34 = arith.mulf %32, %33 : vector<1x768xf32>
      %35 = arith.mulf %31, %34 : vector<1x768xf32>
      %c0_22 = arith.constant 0 : index
      %c0_23 = arith.constant 0 : index
      %36 = vector.load %arg5[%c0_22, %c0_23] : memref<1x768xf32, #tpu.memory_space<vmem>>, vector<1x768xf32>
      %37 = arith.addf %35, %36 : vector<1x768xf32>
      %c0_24 = arith.constant 0 : index
      %c0_25 = arith.constant 0 : index
      %38 = vector.load %arg6[%c0_24, %c0_25] : memref<768x128xf32, #tpu.memory_space<vmem>>, vector<768x128xf32>
      %cst_26 = arith.constant dense<0.000000e+00> : vector<1x128xf32>
      %39 = tpu.matmul %37, %38, %cst_26 {dimension_numbers = #tpu.dot_dimension_numbers<[1], [0], [0], [1], [0, 0, 1, 1], [], []>} : vector<1x768xf32>, vector<768x128xf32>, vector<1x128xf32> -> vector<1x128xf32>
      %c0_27 = arith.constant 0 : index
      %c0_28 = arith.constant 0 : index
      %40 = vector.load %arg7[%c0_27, %c0_28] : memref<1x128xf32, #tpu.memory_space<vmem>>, vector<1x128xf32>
      %41 = arith.addf %39, %40 : vector<1x128xf32>
      %42 = vector.shape_cast %41 : vector<1x128xf32> to vector<1x1x128xf32>
      %c0_29 = arith.constant 0 : index
      %c0_30 = arith.constant 0 : index
      %c0_31 = arith.constant 0 : index
      %43 = vector.load %arg8[%c0_29, %c0_30, %c0_31] : memref<1x1x128xf32, #tpu.memory_space<vmem>>, vector<1x1x128xf32>
      tpu.vector_store %arg8[%c0_29, %c0_30, %c0_31], %42 {strides = array<i32>} : memref<1x1x128xf32, #tpu.memory_space<vmem>>, vector<1x1x128xf32>,
    } else {
    }
    return
  }
  func.func @transform_0(%arg0: i32, %arg1: i32) -> (i32, i32, i32) {
    %c0_i32 = arith.constant 0 : i32
    %c0_i32_0 = arith.constant 0 : i32
    return %arg0, %arg1, %c0_i32 : i32, i32, i32
  }
  func.func @transform_1(%arg0: i32, %arg1: i32) -> (i32, i32) {
    %c0_i32 = arith.constant 0 : i32
    %c0_i32_0 = arith.constant 0 : i32
    %c0_i32_1 = arith.constant 0 : i32
    return %c0_i32, %c0_i32_0 : i32, i32
  }
  func.func @transform_2(%arg0: i32, %arg1: i32) -> (i32, i32) {
    %c0_i32 = arith.constant 0 : i32
    %c0_i32_0 = arith.constant 0 : i32
    %c0_i32_1 = arith.constant 0 : i32
    return %c0_i32, %c0_i32_0 : i32, i32
  }
  func.func @transform_3(%arg0: i32, %arg1: i32) -> (i32, i32) {
    %c0_i32 = arith.constant 0 : i32
    %c0_i32_0 = arith.constant 0 : i32
    %c0_i32_1 = arith.constant 0 : i32
    return %c0_i32, %c0_i32_0 : i32, i32
  }
  func.func @transform_4(%arg0: i32, %arg1: i32) -> (i32, i32) {
    %c0_i32 = arith.constant 0 : i32
    %c0_i32_0 = arith.constant 0 : i32
    %c0_i32_1 = arith.constant 0 : i32
    return %c0_i32, %c0_i32_0 : i32, i32
  }
  func.func @transform_5(%arg0: i32, %arg1: i32) -> (i32, i32) {
    %c0_i32 = arith.constant 0 : i32
    %c0_i32_0 = arith.constant 0 : i32
    %c0_i32_1 = arith.constant 0 : i32
    return %c0_i32, %c0_i32_0 : i32, i32
  }
  func.func @transform_6(%arg0: i32, %arg1: i32) -> (i32, i32, i32) {
    %c0_i32 = arith.constant 0 : i32
    %c0_i32_0 = arith.constant 0 : i32
    %c0_i32_1 = arith.constant 0 : i32
    return %arg0, %c0_i32, %c0_i32_0 : i32, i32, i32
  }
}

</mosaic_0001>

<llo_original>
// kernel: smit_classifier_forward.1
$region0: #{smit_classifier_forward.1}
  #allocation0 [shape = 'u32[]', space=smem, size = 0x4, offset = 0x4, fixed_abs, tag = 'smem constant byte address 0x4 - core index']
  #allocation1 [shape = 'u32[144,128]{1,0:T(1,128)}', space=vmem, size = 0x12000, scoped, tag = 'internal scratch']
  #allocation2 [shape = 'f32[1,768]{1,0:T(1,128)}', space=vmem, size = 0xc00, scoped, tag = 'scratch operand']
  %s0 = inlined_call_operand.vmem [shape: bf16[2,8,512], index: 0, kind: input, shape index: {}]
  %s1 = inlined_call_operand.vmem [shape: bf16[512,768], index: 1, kind: input, shape index: {}]
  %s2 = inlined_call_operand.vmem [shape: f32[1,768], index: 2, kind: input, shape index: {}]
  %s3 = inlined_call_operand.vmem [shape: f32[1,768], index: 3, kind: input, shape index: {}]
  %s4 = inlined_call_operand.vmem [shape: f32[768,128], index: 4, kind: input, shape index: {}]
  %s5 = inlined_call_operand.vmem [shape: f32[1,128], index: 5, kind: input, shape index: {}]
  %s6 = inlined_call_operand.hbm [shape: f32[2,1,128], index: 6, kind: output, shape index: {}]
  %s7 = sld [smem:[#allocation0]]
  $region65: #{smit_classifier_forward.1} parent=0
    _
  %s9 = ssub.s32 1, %s7
  %s10 = scalar_select 0, %s9, %s7
  $region1: #{smit_classifier_forward.1} parent=0
    #allocation3 [shape = 'u8[1024]{0}', space=vmem, size = 0x400, scoped, tag = 'output window, operand 0']
    #allocation4 [shape = 's32[2]{0}', space=sflag, size = 0x8, scoped, tag = 'scoped memory for smit_classifier_forward.1']
    %11 = vsyncpa [#allocation4], 0
    %s12 = scalar_lea.sflag [#allocation4], 1
    %13 = vsyncpa %s12, 0
    loop: start=0, step=1, limit=4
    $region2: #{smit_classifier_forward.1} parent=1 // loop_pre_header
      _
    $region3: #{smit_classifier_forward.1} parent=1 // loop_header
      %s15 = sphi 0, %s19
      %p16 = scmp.ge.s32.totalorder %s15, 4
      %s22 = sphi 0, %s34
      %s23 = sphi 0, %s30
      %s24 = sphi 0, %s22
      %s25 = sphi 0, %s23
      %s26 = sphi 0, %s24
      %s27 = sphi 0, %s25
      %s39 = sphi 0, %s41
      %s42 = sphi 0, %s39
      %s43 = sphi 0, %s42
      %s59 = sphi 0, %s43
      %s63 = sphi 0, %s63
      %s65 = sphi 0, %s63
      %s66 = sphi 0, %s65
      %s80 = sphi 0, %s66
      %s84 = sphi 0, %s84
      %s86 = sphi 0, %s84
      %s87 = sphi 0, %s86
      %s101 = sphi 0, %s87
      %s105 = sphi 0, %s105
      %s107 = sphi 0, %s105
      %s108 = sphi 0, %s107
      %s122 = sphi 0, %s108
      %s126 = sphi 0, %s126
      %s128 = sphi 0, %s126
      %s129 = sphi 0, %s128
      %s143 = sphi 0, %s129
      %s147 = sphi 0, %s147
      %s149 = sphi 0, %s147
      %s150 = sphi 0, %s149
      %s164 = sphi 0, %s150
      %s170 = sphi 0, %s172
      %s173 = sphi 0, %s170
      %s174 = sphi 0, %s173
      %s190 = sphi 0, %s174
    $region4: #{smit_classifier_forward.1} parent=1 // loop_header_branch
      %18 = sbr.rel (%p16) target = $region8
    $region5: #{smit_classifier_forward.1} parent=1 // loop_body
      %s20 = ssub.s32 %s15, 1
      %s21 = ssub.s32 %s15, 2
      %s28 = sadd.s32 1, %s23
      %p29 = scmp.ge.s32.totalorder %s28, 1
      %s30 = scalar_select %p29, 0, %s28
      %s31 = sadd.s32 1, %s22
      %s32 = scalar_select %p29, %s31, %s22
      %p33 = scmp.ge.s32.totalorder %s32, 2
      %s34 = scalar_select %p33, 0, %s32
      %s35 = ssub.s32 %s22, %s34
      %s36 = ssub.s32 %s23, %s30
      %s37 = sor.u32 %s35, %s36
      %p38 = scmp.eq.s32.totalorder %s37, 0
      %s40 = sadd.s32 %s39, 1
      %s41 = scalar_select %p38, %s39, %s40
      %p44 = pneg %p38
      %p45 = scmp.eq.s32.totalorder %s15, 1
      %p46 = por %p44, %p45
      %p47 = scmp.ne.s32.totalorder %s39, %s42
      %p48 = scmp.eq.s32.totalorder %s15, 0
      %p49 = por %p47, %p48
      %p50 = scmp.ne.s32.totalorder %s39, %s42
      %p51 = scmp.eq.s32.totalorder %s20, 1
      %p52 = por %p50, %p51
      %p53 = scmp.ne.s32.totalorder %s42, %s43
      %p54 = scmp.eq.s32.totalorder %s20, 0
      %p55 = por %p53, %p54
      %p56 = scmp.ne.s32.totalorder %s42, %s43
      %p57 = scmp.eq.s32.totalorder %s21, 1
      %p58 = por %p56, %p57
      %p60 = scmp.ne.s32.totalorder %s43, %s59
      %p61 = scmp.eq.s32.totalorder %s21, 0
      %p62 = por %p60, %p61
      %s64 = sadd.s32 %s63, 1
      %p67 = scmp.eq.s32.totalorder %s15, 1
      %p68 = scmp.ne.s32.totalorder %s63, %s65
      %p69 = scmp.eq.s32.totalorder %s15, 0
      %p70 = por %p68, %p69
      %p71 = scmp.ne.s32.totalorder %s63, %s65
      %p72 = scmp.eq.s32.totalorder %s20, 1
      %p73 = por %p71, %p72
      %p74 = scmp.ne.s32.totalorder %s65, %s66
      %p75 = scmp.eq.s32.totalorder %s20, 0
      %p76 = por %p74, %p75
      %p77 = scmp.ne.s32.totalorder %s65, %s66
      %p78 = scmp.eq.s32.totalorder %s21, 1
      %p79 = por %p77, %p78
      %p81 = scmp.ne.s32.totalorder %s66, %s80
      %p82 = scmp.eq.s32.totalorder %s21, 0
      %p83 = por %p81, %p82
      %s85 = sadd.s32 %s84, 1
      %p88 = scmp.eq.s32.totalorder %s15, 1
      %p89 = scmp.ne.s32.totalorder %s84, %s86
      %p90 = scmp.eq.s32.totalorder %s15, 0
      %p91 = por %p89, %p90
      %p92 = scmp.ne.s32.totalorder %s84, %s86
      %p93 = scmp.eq.s32.totalorder %s20, 1
      %p94 = por %p92, %p93
      %p95 = scmp.ne.s32.totalorder %s86, %s87
      %p96 = scmp.eq.s32.totalorder %s20, 0
      %p97 = por %p95, %p96
      %p98 = scmp.ne.s32.totalorder %s86, %s87
      %p99 = scmp.eq.s32.totalorder %s21, 1
      %p100 = por %p98, %p99
      %p102 = scmp.ne.s32.totalorder %s87, %s101
      %p103 = scmp.eq.s32.totalorder %s21, 0
      %p104 = por %p102, %p103
      %s106 = sadd.s32 %s105, 1
      %p109 = scmp.eq.s32.totalorder %s15, 1
      %p110 = scmp.ne.s32.totalorder %s105, %s107
      %p111 = scmp.eq.s32.totalorder %s15, 0
      %p112 = por %p110, %p111
      %p113 = scmp.ne.s32.totalorder %s105, %s107
      %p114 = scmp.eq.s32.totalorder %s20, 1
      %p115 = por %p113, %p114
      %p116 = scmp.ne.s32.totalorder %s107, %s108
      %p117 = scmp.eq.s32.totalorder %s20, 0
      %p118 = por %p116, %p117
      %p119 = scmp.ne.s32.totalorder %s107, %s108
      %p120 = scmp.eq.s32.totalorder %s21, 1
      %p121 = por %p119, %p120
      %p123 = scmp.ne.s32.totalorder %s108, %s122
      %p124 = scmp.eq.s32.totalorder %s21, 0
      %p125 = por %p123, %p124
      %s127 = sadd.s32 %s126, 1
      %p130 = scmp.eq.s32.totalorder %s15, 1
      %p131 = scmp.ne.s32.totalorder %s126, %s128
      %p132 = scmp.eq.s32.totalorder %s15, 0
      %p133 = por %p131, %p132
      %p134 = scmp.ne.s32.totalorder %s126, %s128
      %p135 = scmp.eq.s32.totalorder %s20, 1
      %p136 = por %p134, %p135
      %p137 = scmp.ne.s32.totalorder %s128, %s129
      %p138 = scmp.eq.s32.totalorder %s20, 0
      %p139 = por %p137, %p138
      %p140 = scmp.ne.s32.totalorder %s128, %s129
      %p141 = scmp.eq.s32.totalorder %s21, 1
      %p142 = por %p140, %p141
      %p144 = scmp.ne.s32.totalorder %s129, %s143
      %p145 = scmp.eq.s32.totalorder %s21, 0
      %p146 = por %p144, %p145
      %s148 = sadd.s32 %s147, 1
      %p151 = scmp.eq.s32.totalorder %s15, 1
      %p152 = scmp.ne.s32.totalorder %s147, %s149
      %p153 = scmp.eq.s32.totalorder %s15, 0
      %p154 = por %p152, %p153
      %p155 = scmp.ne.s32.totalorder %s147, %s149
      %p156 = scmp.eq.s32.totalorder %s20, 1
      %p157 = por %p155, %p156
      %p158 = scmp.ne.s32.totalorder %s149, %s150
      %p159 = scmp.eq.s32.totalorder %s20, 0
      %p160 = por %p158, %p159
      %p161 = scmp.ne.s32.totalorder %s149, %s150
      %p162 = scmp.eq.s32.totalorder %s21, 1
      %p163 = por %p161, %p162
      %p165 = scmp.ne.s32.totalorder %s150, %s164
      %p166 = scmp.eq.s32.totalorder %s21, 0
      %p167 = por %p165, %p166
      %s168 = ssub.s32 %s22, %s34
      %p169 = scmp.eq.s32.totalorder %s168, 0
      %s171 = sadd.s32 %s170, 1
      %s172 = scalar_select %p169, %s170, %s171
      %p175 = pneg %p169
      %p176 = scmp.eq.s32.totalorder %s15, 1
      %p177 = por %p175, %p176
      %p178 = scmp.ne.s32.totalorder %s170, %s173
      %p179 = scmp.eq.s32.totalorder %s15, 0
      %p180 = por %p178, %p179
      %p181 = scmp.ne.s32.totalorder %s170, %s173
      %p182 = scmp.eq.s32.totalorder %s20, 1
      %p183 = por %p181, %p182
      %p184 = scmp.ne.s32.totalorder %s173, %s174
      %p185 = scmp.eq.s32.totalorder %s20, 0
      %p186 = por %p184, %p185
      %p187 = scmp.ne.s32.totalorder %s173, %s174
      %p188 = scmp.eq.s32.totalorder %s21, 1
      %p189 = por %p187, %p188
      %p191 = scmp.ne.s32.totalorder %s174, %s190
      %p192 = scmp.eq.s32.totalorder %s21, 0
      %p193 = por %p191, %p192
      %p194 = scmp.le.s32.totalorder 1, %s15
      %p195 = scmp.lt.s32.totalorder %s15, 3
      %p196 = pnand %p194, %p195
      %p197 = pneg %p196
      // Predicated region
      $region9: #{smit_classifier_forward.1} parent=5 // pred_check
        _
      $region10: #{smit_classifier_forward.1} parent=5 // pred_check_branch
        %199 = sbr.rel (%p196) target = $region12
      $region11: #{smit_classifier_forward.1} parent=5 // pred_region
        %s200 = ssub.s32 %s15, 1
        // Predicated region
        $region13: #{smit_classifier_forward.1} parent=11 // pred_check
          %p201 = pneg %p76
        $region14: #{smit_classifier_forward.1} parent=11 // pred_check_branch
          %203 = sbr.rel (%p201) target = $region16
        $region15: #{smit_classifier_forward.1} parent=11 // pred_region
          _
        $region16: #{smit_classifier_forward.1} parent=11 // pred_fallthru
          _
        // Predicated region
        $region17: #{smit_classifier_forward.1} parent=11 // pred_check
          %p204 = pneg %p97
        $region18: #{smit_classifier_forward.1} parent=11 // pred_check_branch
          %206 = sbr.rel (%p204) target = $region20
        $region19: #{smit_classifier_forward.1} parent=11 // pred_region
          _
        $region20: #{smit_classifier_forward.1} parent=11 // pred_fallthru
          _
        // Predicated region
        $region21: #{smit_classifier_forward.1} parent=11 // pred_check
          %p207 = pneg %p118
        $region22: #{smit_classifier_forward.1} parent=11 // pred_check_branch
          %209 = sbr.rel (%p207) target = $region24
        $region23: #{smit_classifier_forward.1} parent=11 // pred_region
          _
        $region24: #{smit_classifier_forward.1} parent=11 // pred_fallthru
          _
        // Predicated region
        $region25: #{smit_classifier_forward.1} parent=11 // pred_check
          %p210 = pneg %p139
        $region26: #{smit_classifier_forward.1} parent=11 // pred_check_branch
          %212 = sbr.rel (%p210) target = $region28
        $region27: #{smit_classifier_forward.1} parent=11 // pred_region
          _
        $region28: #{smit_classifier_forward.1} parent=11 // pred_fallthru
          _
        // Predicated region
        $region29: #{smit_classifier_forward.1} parent=11 // pred_check
          %p213 = pneg %p160
        $region30: #{smit_classifier_forward.1} parent=11 // pred_check_branch
          %215 = sbr.rel (%p213) target = $region32
        $region31: #{smit_classifier_forward.1} parent=11 // pred_region
          _
        $region32: #{smit_classifier_forward.1} parent=11 // pred_fallthru
          _
      $region12: #{smit_classifier_forward.1} parent=5 // pred_fallthru
        _
      %p216 = scmp.lt.s32.totalorder %s15, 2
      // Predicated region
      $region33: #{smit_classifier_forward.1} parent=5 // pred_check
        %p217 = pneg %p216
      $region34: #{smit_classifier_forward.1} parent=5 // pred_check_branch
        %219 = sbr.rel (%p217) target = $region36
      $region35: #{smit_classifier_forward.1} parent=5 // pred_region
        // Predicated region
        $region37: #{smit_classifier_forward.1} parent=35 // pred_check
          %p220 = pneg %p49
        $region38: #{smit_classifier_forward.1} parent=35 // pred_check_branch
          %222 = sbr.rel (%p220) target = $region40
        $region39: #{smit_classifier_forward.1} parent=35 // pred_region
          %p223 = scmp.lt.s32.totalorder %s22, 1
          %s224 = scalar_select %p223, %s22, 1
          %p225 = scmp.lt.s32.totalorder %s23, 0
          %s226 = scalar_select %p225, %s23, 0
          %s227 = smul.addr %s226, 4
          %s228 = smul.addr %s224, 4
          %s229 = sadd.s32 %s227, %s228
          %s230 = smul.addr %s229, 4
          %s231 = scalar_lea.vmem %s0, %s230
        $region40: #{smit_classifier_forward.1} parent=35 // pred_fallthru
          _
      $region36: #{smit_classifier_forward.1} parent=5 // pred_fallthru
        _
      %p232 = scmp.le.s32.totalorder 1, %s15
      %p233 = scmp.lt.s32.totalorder %s15, 3
      %p234 = pnand %p232, %p233
      %p235 = pneg %p234
      // Predicated region
      $region41: #{smit_classifier_forward.1} parent=5 // pred_check
        _
      $region42: #{smit_classifier_forward.1} parent=5 // pred_check_branch
        %237 = sbr.rel (%p234) target = $region44
      $region43: #{smit_classifier_forward.1} parent=5 // pred_region
        %s238 = ssub.s32 %s15, 1
        %p239 = scmp.lt.s32.totalorder %s24, 1
        %s240 = scalar_select %p239, %s24, 1
        %p241 = scmp.lt.s32.totalorder %s25, 0
        %s242 = scalar_select %p241, %s25, 0
        %s243 = smul.addr %s242, 4
        %s244 = smul.addr %s240, 4
        %s245 = sadd.s32 %s243, %s244
        %s246 = smul.addr %s245, 4
        %s247 = scalar_lea.vmem %s0, %s246
        %p248 = pneg %p55
        %p249 = pneg %p52
        %p250 = pneg %p76
        %p251 = pneg %p73
        %p252 = pneg %p97
        %p253 = pneg %p94
        %p254 = pneg %p118
        %p255 = pneg %p115
        %p256 = pneg %p139
        %p257 = pneg %p136
        %p258 = pneg %p160
        %p259 = pneg %p157
        %p260 = pneg %p186
        %p261 = pneg %p183
        %s262 = sand.u32 %s173, 1
        %s263 = scalar_lea.sflag [#allocation4], %s262
        %s264 = sand.u32 %s173, 1
        %s265 = scalar_lea.vmem [#allocation3], %s264
        %p266 = scmp.lt.s32.totalorder %s24, 1
        %s267 = scalar_select %p266, %s24, 1
        %p268 = scmp.lt.s32.totalorder %s25, 0
        %s269 = scalar_select %p268, %s25, 0
        %s270 = smul.addr %s269, 4
        %s271 = smul.addr %s267, 4
        %s272 = sadd.s32 %s270, %s271
        %s273 = smul.addr %s272, 4
        %s274 = scalar_lea.vmem %s0, %s273
        %p275 = scmp.eq.s32.totalorder %s25, 0
        // Predicated region
        $region45: #{smit_classifier_forward.1} parent=43 // pred_check
          %p276 = pneg %p275
        $region46: #{smit_classifier_forward.1} parent=43 // pred_check_branch
          %278 = sbr.rel (%p276) target = $region48
        $region47: #{smit_classifier_forward.1} parent=43 // pred_region
          %v279 = vlaneseq
          %vm280 = vcmp.ge.s32.totalorder %v279, 0
          %vm281 = vcmp.lt.s32.totalorder %v279, 768
          %vm282 = vmand %vm280, %vm281
          %283 = vst.msk [vmem:[#allocation2] sm:$0x3f] %vm282, 0.0
        $region48: #{smit_classifier_forward.1} parent=43 // pred_fallthru
          _
        %v284 = vld [vmem:[%s274] sm:$0xff]
        %v285 = vld [vmem:[%s274 + $0x8] sm:$0xff]
        %v286 = vld [vmem:[%s1] sm:$0xff]
        %v287 = vld [vmem:[%s1 + $0x8] sm:$0xff]
        %v288 = vld [vmem:[%s1 + $0x10] sm:$0xff]
        %v289 = vld [vmem:[%s1 + $0x18] sm:$0xff]
        %v290 = vld [vmem:[%s1 + $0x20] sm:$0xff]
        %v291 = vld [vmem:[%s1 + $0x28] sm:$0xff]
        %v292 = vld [vmem:[%s1 + $0x30] sm:$0xff]
        %v293 = vld [vmem:[%s1 + $0x38] sm:$0xff]
        %v294 = vld [vmem:[%s1 + $0x40] sm:$0xff]
        %v295 = vld [vmem:[%s1 + $0x48] sm:$0xff]
        %v296 = vld [vmem:[%s1 + $0x50] sm:$0xff]
        %v297 = vld [vmem:[%s1 + $0x58] sm:$0xff]
        %v298 = vld [vmem:[%s1 + $0x60] sm:$0xff]
        %v299 = vld [vmem:[%s1 + $0x68] sm:$0xff]
        %v300 = vld [vmem:[%s1 + $0x70] sm:$0xff]
        %v301 = vld [vmem:[%s1 + $0x78] sm:$0xff]
        %v302 = vld [vmem:[%s1 + $0x80] sm:$0xff]
        %v303 = vld [vmem:[%s1 + $0x88] sm:$0xff]
        %v304 = vld [vmem:[%s1 + $0x90] sm:$0xff]
        %v305 = vld [vmem:[%s1 + $0x98] sm:$0xff]
        %v306 = vld [vmem:[%s1 + $0xa0] sm:$0xff]
        %v307 = vld [vmem:[%s1 + $0xa8] sm:$0xff]
        %v308 = vld [vmem:[%s1 + $0xb0] sm:$0xff]
        %v309 = vld [vmem:[%s1 + $0xb8] sm:$0xff]
        %v310 = vld [vmem:[%s1 + $0xc0] sm:$0xff]
        %v311 = vld [vmem:[%s1 + $0xc8] sm:$0xff]
        %v312 = vld [vmem:[%s1 + $0xd0] sm:$0xff]
        %v313 = vld [vmem:[%s1 + $0xd8] sm:$0xff]
        %v314 = vld [vmem:[%s1 + $0xe0] sm:$0xff]
        %v315 = vld [vmem:[%s1 + $0xe8] sm:$0xff]
        %v316 = vld [vmem:[%s1 + $0xf0] sm:$0xff]
        %v317 = vld [vmem:[%s1 + $0xf8] sm:$0xff]
        %v318 = vld [vmem:[%s1 + $0x100] sm:$0xff]
        %v319 = vld [vmem:[%s1 + $0x108] sm:$0xff]
        %v320 = vld [vmem:[%s1 + $0x110] sm:$0xff]
        %v321 = vld [vmem:[%s1 + $0x118] sm:$0xff]
        %v322 = vld [vmem:[%s1 + $0x120] sm:$0xff]
        %v323 = vld [vmem:[%s1 + $0x128] sm:$0xff]
        %v324 = vld [vmem:[%s1 + $0x130] sm:$0xff]
        %v325 = vld [vmem:[%s1 + $0x138] sm:$0xff]
        %v326 = vld [vmem:[%s1 + $0x140] sm:$0xff]
        %v327 = vld [vmem:[%s1 + $0x148] sm:$0xff]
        %v328 = vld [vmem:[%s1 + $0x150] sm:$0xff]
        %v329 = vld [vmem:[%s1 + $0x158] sm:$0xff]
        %v330 = vld [vmem:[%s1 + $0x160] sm:$0xff]
        %v331 = vld [vmem:[%s1 + $0x168] sm:$0xff]
        %v332 = vld [vmem:[%s1 + $0x170] sm:$0xff]
        %v333 = vld [vmem:[%s1 + $0x178] sm:$0xff]
        %v334 = vld [vmem:[%s1 + $0x180] sm:$0xff]
        %v335 = vld [vmem:[%s1 + $0x188] sm:$0xff]
        %v336 = vld [vmem:[%s1 + $0x190] sm:$0xff]
        %v337 = vld [vmem:[%s1 + $0x198] sm:$0xff]
        %v338 = vld [vmem:[%s1 + $0x1a0] sm:$0xff]
        %v339 = vld [vmem:[%s1 + $0x1a8] sm:$0xff]
        %v340 = vld [vmem:[%s1 + $0x1b0] sm:$0xff]
        %v341 = vld [vmem:[%s1 + $0x1b8] sm:$0xff]
        %v342 = vld [vmem:[%s1 + $0x1c0] sm:$0xff]
        %v343 = vld [vmem:[%s1 + $0x1c8] sm:$0xff]
        %v344 = vld [vmem:[%s1 + $0x1d0] sm:$0xff]
        %v345 = vld [vmem:[%s1 + $0x1d8] sm:$0xff]
        %v346 = vld [vmem:[%s1 + $0x1e0] sm:$0xff]
        %v347 = vld [vmem:[%s1 + $0x1e8] sm:$0xff]
        %v348 = vld [vmem:[%s1 + $0x1f0] sm:$0xff]
        %v349 = vld [vmem:[%s1 + $0x1f8] sm:$0xff]
        %v350 = vld [vmem:[%s1 + $0x200] sm:$0xff]
        %v351 = vld [vmem:[%s1 + $0x208] sm:$0xff]
        %v352 = vld [vmem:[%s1 + $0x210] sm:$0xff]
        %v353 = vld [vmem:[%s1 + $0x218] sm:$0xff]
        %v354 = vld [vmem:[%s1 + $0x220] sm:$0xff]
        %v355 = vld [vmem:[%s1 + $0x228] sm:$0xff]
        %v356 = vld [vmem:[%s1 + $0x230] sm:$0xff]
        %v357 = vld [vmem:[%s1 + $0x238] sm:$0xff]
        %v358 = vld [vmem:[%s1 + $0x240] sm:$0xff]
        %v359 = vld [vmem:[%s1 + $0x248] sm:$0xff]
        %v360 = vld [vmem:[%s1 + $0x250] sm:$0xff]
        %v361 = vld [vmem:[%s1 + $0x258] sm:$0xff]
        %v362 = vld [vmem:[%s1 + $0x260] sm:$0xff]
        %v363 = vld [vmem:[%s1 + $0x268] sm:$0xff]
        %v364 = vld [vmem:[%s1 + $0x270] sm:$0xff]
        %v365 = vld [vmem:[%s1 + $0x278] sm:$0xff]
        %v366 = vld [vmem:[%s1 + $0x280] sm:$0xff]
        %v367 = vld [vmem:[%s1 + $0x288] sm:$0xff]
        %v368 = vld [vmem:[%s1 + $0x290] sm:$0xff]
        %v369 = vld [vmem:[%s1 + $0x298] sm:$0xff]
        %v370 = vld [vmem:[%s1 + $0x2a0] sm:$0xff]
        %v371 = vld [vmem:[%s1 + $0x2a8] sm:$0xff]
        %v372 = vld [vmem:[%s1 + $0x2b0] sm:$0xff]
        %v373 = vld [vmem:[%s1 + $0x2b8] sm:$0xff]
        %v374 = vld [vmem:[%s1 + $0x2c0] sm:$0xff]
        %v375 = vld [vmem:[%s1 + $0x2c8] sm:$0xff]
        %v376 = vld [vmem:[%s1 + $0x2d0] sm:$0xff]
        %v377 = vld [vmem:[%s1 + $0x2d8] sm:$0xff]
        %v378 = vld [vmem:[%s1 + $0x2e0] sm:$0xff]
        %v379 = vld [vmem:[%s1 + $0x2e8] sm:$0xff]
        %v380 = vld [vmem:[%s1 + $0x2f0] sm:$0xff]
        %v381 = vld [vmem:[%s1 + $0x2f8] sm:$0xff]
        %v382 = vld [vmem:[%s1 + $0x300] sm:$0xff]
        %v383 = vld [vmem:[%s1 + $0x308] sm:$0xff]
        %v384 = vld [vmem:[%s1 + $0x310] sm:$0xff]
        %v385 = vld [vmem:[%s1 + $0x318] sm:$0xff]
        %v386 = vld [vmem:[%s1 + $0x320] sm:$0xff]
        %v387 = vld [vmem:[%s1 + $0x328] sm:$0xff]
        %v388 = vld [vmem:[%s1 + $0x330] sm:$0xff]
        %v389 = vld [vmem:[%s1 + $0x338] sm:$0xff]
        %v390 = vld [vmem:[%s1 + $0x340] sm:$0xff]
        %v391 = vld [vmem:[%s1 + $0x348] sm:$0xff]
        %v392 = vld [vmem:[%s1 + $0x350] sm:$0xff]
        %v393 = vld [vmem:[%s1 + $0x358] sm:$0xff]
        %v394 = vld [vmem:[%s1 + $0x360] sm:$0xff]
        %v395 = vld [vmem:[%s1 + $0x368] sm:$0xff]
        %v396 = vld [vmem:[%s1 + $0x370] sm:$0xff]
        %v397 = vld [vmem:[%s1 + $0x378] sm:$0xff]
        %v398 = vld [vmem:[%s1 + $0x380] sm:$0xff]
        %v399 = vld [vmem:[%s1 + $0x388] sm:$0xff]
        %v400 = vld [vmem:[%s1 + $0x390] sm:$0xff]
        %v401 = vld [vmem:[%s1 + $0x398] sm:$0xff]
        %v402 = vld [vmem:[%s1 + $0x3a0] sm:$0xff]
        %v403 = vld [vmem:[%s1 + $0x3a8] sm:$0xff]
        %v404 = vld [vmem:[%s1 + $0x3b0] sm:$0xff]
        %v405 = vld [vmem:[%s1 + $0x3b8] sm:$0xff]
        %v406 = vld [vmem:[%s1 + $0x3c0] sm:$0xff]
        %v407 = vld [vmem:[%s1 + $0x3c8] sm:$0xff]
        %v408 = vld [vmem:[%s1 + $0x3d0] sm:$0xff]
        %v409 = vld [vmem:[%s1 + $0x3d8] sm:$0xff]
        %v410 = vld [vmem:[%s1 + $0x3e0] sm:$0xff]
        %v411 = vld [vmem:[%s1 + $0x3e8] sm:$0xff]
        %v412 = vld [vmem:[%s1 + $0x3f0] sm:$0xff]
        %v413 = vld [vmem:[%s1 + $0x3f8] sm:$0xff]
        %v414 = vld [vmem:[%s1 + $0x400] sm:$0xff]
        %v415 = vld [vmem:[%s1 + $0x408] sm:$0xff]
        %v416 = vld [vmem:[%s1 + $0x410] sm:$0xff]
        %v417 = vld [vmem:[%s1 + $0x418] sm:$0xff]
        %v418 = vld [vmem:[%s1 + $0x420] sm:$0xff]
        %v419 = vld [vmem:[%s1 + $0x428] sm:$0xff]
        %v420 = vld [vmem:[%s1 + $0x430] sm:$0xff]
        %v421 = vld [vmem:[%s1 + $0x438] sm:$0xff]
        %v422 = vld [vmem:[%s1 + $0x440] sm:$0xff]
        %v423 = vld [vmem:[%s1 + $0x448] sm:$0xff]
        %v424 = vld [vmem:[%s1 + $0x450] sm:$0xff]
        %v425 = vld [vmem:[%s1 + $0x458] sm:$0xff]
        %v426 = vld [vmem:[%s1 + $0x460] sm:$0xff]
        %v427 = vld [vmem:[%s1 + $0x468] sm:$0xff]
        %v428 = vld [vmem:[%s1 + $0x470] sm:$0xff]
        %v429 = vld [vmem:[%s1 + $0x478] sm:$0xff]
        %v430 = vld [vmem:[%s1 + $0x480] sm:$0xff]
        %v431 = vld [vmem:[%s1 + $0x488] sm:$0xff]
        %v432 = vld [vmem:[%s1 + $0x490] sm:$0xff]
        %v433 = vld [vmem:[%s1 + $0x498] sm:$0xff]
        %v434 = vld [vmem:[%s1 + $0x4a0] sm:$0xff]
        %v435 = vld [vmem:[%s1 + $0x4a8] sm:$0xff]
        %v436 = vld [vmem:[%s1 + $0x4b0] sm:$0xff]
        %v437 = vld [vmem:[%s1 + $0x4b8] sm:$0xff]
        %v438 = vld [vmem:[%s1 + $0x4c0] sm:$0xff]
        %v439 = vld [vmem:[%s1 + $0x4c8] sm:$0xff]
        %v440 = vld [vmem:[%s1 + $0x4d0] sm:$0xff]
        %v441 = vld [vmem:[%s1 + $0x4d8] sm:$0xff]
        %v442 = vld [vmem:[%s1 + $0x4e0] sm:$0xff]
        %v443 = vld [vmem:[%s1 + $0x4e8] sm:$0xff]
        %v444 = vld [vmem:[%s1 + $0x4f0] sm:$0xff]
        %v445 = vld [vmem:[%s1 + $0x4f8] sm:$0xff]
        %v446 = vld [vmem:[%s1 + $0x500] sm:$0xff]
        %v447 = vld [vmem:[%s1 + $0x508] sm:$0xff]
        %v448 = vld [vmem:[%s1 + $0x510] sm:$0xff]
        %v449 = vld [vmem:[%s1 + $0x518] sm:$0xff]
        %v450 = vld [vmem:[%s1 + $0x520] sm:$0xff]
        %v451 = vld [vmem:[%s1 + $0x528] sm:$0xff]
        %v452 = vld [vmem:[%s1 + $0x530] sm:$0xff]
        %v453 = vld [vmem:[%s1 + $0x538] sm:$0xff]
        %v454 = vld [vmem:[%s1 + $0x540] sm:$0xff]
        %v455 = vld [vmem:[%s1 + $0x548] sm:$0xff]
        %v456 = vld [vmem:[%s1 + $0x550] sm:$0xff]
        %v457 = vld [vmem:[%s1 + $0x558] sm:$0xff]
        %v458 = vld [vmem:[%s1 + $0x560] sm:$0xff]
        %v459 = vld [vmem:[%s1 + $0x568] sm:$0xff]
        %v460 = vld [vmem:[%s1 + $0x570] sm:$0xff]
        %v461 = vld [vmem:[%s1 + $0x578] sm:$0xff]
        %v462 = vld [vmem:[%s1 + $0x580] sm:$0xff]
        %v463 = vld [vmem:[%s1 + $0x588] sm:$0xff]
        %v464 = vld [vmem:[%s1 + $0x590] sm:$0xff]
        %v465 = vld [vmem:[%s1 + $0x598] sm:$0xff]
        %v466 = vld [vmem:[%s1 + $0x5a0] sm:$0xff]
        %v467 = vld [vmem:[%s1 + $0x5a8] sm:$0xff]
        %v468 = vld [vmem:[%s1 + $0x5b0] sm:$0xff]
        %v469 = vld [vmem:[%s1 + $0x5b8] sm:$0xff]
        %v470 = vld [vmem:[%s1 + $0x5c0] sm:$0xff]
        %v471 = vld [vmem:[%s1 + $0x5c8] sm:$0xff]
        %v472 = vld [vmem:[%s1 + $0x5d0] sm:$0xff]
        %v473 = vld [vmem:[%s1 + $0x5d8] sm:$0xff]
        %v474 = vld [vmem:[%s1 + $0x5e0] sm:$0xff]
        %v475 = vld [vmem:[%s1 + $0x5e8] sm:$0xff]
        %v476 = vld [vmem:[%s1 + $0x5f0] sm:$0xff]
        %v477 = vld [vmem:[%s1 + $0x5f8] sm:$0xff]
        %v480 = vunpack.c.l.b16 %v284
        %v481 = vunpack.c.h.b16 %v284
        %v482 = vunpack.c.l.b16 %v285
        %v483 = vunpack.c.h.b16 %v285
        %v484 = vpack.c.b16 %v480, %v480
        %v485 = vpack.c.b16 %v481, %v481
        %v486 = vpack.c.b16 %v482, %v482
        %v487 = vpack.c.b16 %v483, %v483
        %v684 = vunpack.c.l.b16 %v286
        %v685 = vunpack.c.h.b16 %v286
        %v686 = vunpack.c.l.b16 %v287
        %v687 = vunpack.c.h.b16 %v287
        %v688 = vunpack.c.l.b16 %v288
        %v689 = vunpack.c.h.b16 %v288
        %v690 = vunpack.c.l.b16 %v289
        %v691 = vunpack.c.h.b16 %v289
        %v692 = vunpack.c.l.b16 %v290
        %v693 = vunpack.c.h.b16 %v290
        %v694 = vunpack.c.l.b16 %v291
        %v695 = vunpack.c.h.b16 %v291
        %v696 = vunpack.c.l.b16 %v292
        %v697 = vunpack.c.h.b16 %v292
        %v698 = vunpack.c.l.b16 %v293
        %v699 = vunpack.c.h.b16 %v293
        %v700 = vunpack.c.l.b16 %v294
        %v701 = vunpack.c.h.b16 %v294
        %v702 = vunpack.c.l.b16 %v295
        %v703 = vunpack.c.h.b16 %v295
        %v704 = vunpack.c.l.b16 %v296
        %v705 = vunpack.c.h.b16 %v296
        %v706 = vunpack.c.l.b16 %v297
        %v707 = vunpack.c.h.b16 %v297
        %v708 = vunpack.c.l.b16 %v298
        %v709 = vunpack.c.h.b16 %v298
        %v710 = vunpack.c.l.b16 %v299
        %v711 = vunpack.c.h.b16 %v299
        %v712 = vunpack.c.l.b16 %v300
        %v713 = vunpack.c.h.b16 %v300
        %v714 = vunpack.c.l.b16 %v301
        %v715 = vunpack.c.h.b16 %v301
        %v716 = vunpack.c.l.b16 %v302
        %v717 = vunpack.c.h.b16 %v302
        %v718 = vunpack.c.l.b16 %v303
        %v719 = vunpack.c.h.b16 %v303
        %v720 = vunpack.c.l.b16 %v304
        %v721 = vunpack.c.h.b16 %v304
        %v722 = vunpack.c.l.b16 %v305
        %v723 = vunpack.c.h.b16 %v305
        %v724 = vunpack.c.l.b16 %v306
        %v725 = vunpack.c.h.b16 %v306
        %v726 = vunpack.c.l.b16 %v307
        %v727 = vunpack.c.h.b16 %v307
        %v728 = vunpack.c.l.b16 %v308
        %v729 = vunpack.c.h.b16 %v308
        %v730 = vunpack.c.l.b16 %v309
        %v731 = vunpack.c.h.b16 %v309
        %v732 = vunpack.c.l.b16 %v310
        %v733 = vunpack.c.h.b16 %v310
        %v734 = vunpack.c.l.b16 %v311
        %v735 = vunpack.c.h.b16 %v311
        %v736 = vunpack.c.l.b16 %v312
        %v737 = vunpack.c.h.b16 %v312
        %v738 = vunpack.c.l.b16 %v313
        %v739 = vunpack.c.h.b16 %v313
        %v740 = vunpack.c.l.b16 %v314
        %v741 = vunpack.c.h.b16 %v314
        %v742 = vunpack.c.l.b16 %v315
        %v743 = vunpack.c.h.b16 %v315
        %v744 = vunpack.c.l.b16 %v316
        %v745 = vunpack.c.h.b16 %v316
        %v746 = vunpack.c.l.b16 %v317
        %v747 = vunpack.c.h.b16 %v317
        %v748 = vunpack.c.l.b16 %v318
        %v749 = vunpack.c.h.b16 %v318
        %v750 = vunpack.c.l.b16 %v319
        %v751 = vunpack.c.h.b16 %v319
        %v752 = vunpack.c.l.b16 %v320
        %v753 = vunpack.c.h.b16 %v320
        %v754 = vunpack.c.l.b16 %v321
        %v755 = vunpack.c.h.b16 %v321
        %v756 = vunpack.c.l.b16 %v322
        %v757 = vunpack.c.h.b16 %v322
        %v758 = vunpack.c.l.b16 %v323
        %v759 = vunpack.c.h.b16 %v323
        %v760 = vunpack.c.l.b16 %v324
        %v761 = vunpack.c.h.b16 %v324
        %v762 = vunpack.c.l.b16 %v325
        %v763 = vunpack.c.h.b16 %v325
        %v764 = vunpack.c.l.b16 %v326
        %v765 = vunpack.c.h.b16 %v326
        %v766 = vunpack.c.l.b16 %v327
        %v767 = vunpack.c.h.b16 %v327
        %v768 = vunpack.c.l.b16 %v328
        %v769 = vunpack.c.h.b16 %v328
        %v770 = vunpack.c.l.b16 %v329
        %v771 = vunpack.c.h.b16 %v329
        %v772 = vunpack.c.l.b16 %v330
        %v773 = vunpack.c.h.b16 %v330
        %v774 = vunpack.c.l.b16 %v331
        %v775 = vunpack.c.h.b16 %v331
        %v776 = vunpack.c.l.b16 %v332
        %v777 = vunpack.c.h.b16 %v332
        %v778 = vunpack.c.l.b16 %v333
        %v779 = vunpack.c.h.b16 %v333
        %v780 = vunpack.c.l.b16 %v334
        %v781 = vunpack.c.h.b16 %v334
        %v782 = vunpack.c.l.b16 %v335
        %v783 = vunpack.c.h.b16 %v335
        %v784 = vunpack.c.l.b16 %v336
        %v785 = vunpack.c.h.b16 %v336
        %v786 = vunpack.c.l.b16 %v337
        %v787 = vunpack.c.h.b16 %v337
        %v788 = vunpack.c.l.b16 %v338
        %v789 = vunpack.c.h.b16 %v338
        %v790 = vunpack.c.l.b16 %v339
        %v791 = vunpack.c.h.b16 %v339
        %v792 = vunpack.c.l.b16 %v340
        %v793 = vunpack.c.h.b16 %v340
        %v794 = vunpack.c.l.b16 %v341
        %v795 = vunpack.c.h.b16 %v341
        %v796 = vunpack.c.l.b16 %v342
        %v797 = vunpack.c.h.b16 %v342
        %v798 = vunpack.c.l.b16 %v343
        %v799 = vunpack.c.h.b16 %v343
        %v800 = vunpack.c.l.b16 %v344
        %v801 = vunpack.c.h.b16 %v344
        %v802 = vunpack.c.l.b16 %v345
        %v803 = vunpack.c.h.b16 %v345
        %v804 = vunpack.c.l.b16 %v346
        %v805 = vunpack.c.h.b16 %v346
        %v806 = vunpack.c.l.b16 %v347
        %v807 = vunpack.c.h.b16 %v347
        %v808 = vunpack.c.l.b16 %v348
        %v809 = vunpack.c.h.b16 %v348
        %v810 = vunpack.c.l.b16 %v349
        %v811 = vunpack.c.h.b16 %v349
        %v812 = vunpack.c.l.b16 %v350
        %v813 = vunpack.c.h.b16 %v350
        %v814 = vunpack.c.l.b16 %v351
        %v815 = vunpack.c.h.b16 %v351
        %v816 = vunpack.c.l.b16 %v352
        %v817 = vunpack.c.h.b16 %v352
        %v818 = vunpack.c.l.b16 %v353
        %v819 = vunpack.c.h.b16 %v353
        %v820 = vunpack.c.l.b16 %v354
        %v821 = vunpack.c.h.b16 %v354
        %v822 = vunpack.c.l.b16 %v355
        %v823 = vunpack.c.h.b16 %v355
        %v824 = vunpack.c.l.b16 %v356
        %v825 = vunpack.c.h.b16 %v356
        %v826 = vunpack.c.l.b16 %v357
        %v827 = vunpack.c.h.b16 %v357
        %v828 = vunpack.c.l.b16 %v358
        %v829 = vunpack.c.h.b16 %v358
        %v830 = vunpack.c.l.b16 %v359
        %v831 = vunpack.c.h.b16 %v359
        %v832 = vunpack.c.l.b16 %v360
        %v833 = vunpack.c.h.b16 %v360
        %v834 = vunpack.c.l.b16 %v361
        %v835 = vunpack.c.h.b16 %v361
        %v836 = vunpack.c.l.b16 %v362
        %v837 = vunpack.c.h.b16 %v362
        %v838 = vunpack.c.l.b16 %v363
        %v839 = vunpack.c.h.b16 %v363
        %v840 = vunpack.c.l.b16 %v364
        %v841 = vunpack.c.h.b16 %v364
        %v842 = vunpack.c.l.b16 %v365
        %v843 = vunpack.c.h.b16 %v365
        %v844 = vunpack.c.l.b16 %v366
        %v845 = vunpack.c.h.b16 %v366
        %v846 = vunpack.c.l.b16 %v367
        %v847 = vunpack.c.h.b16 %v367
        %v848 = vunpack.c.l.b16 %v368
        %v849 = vunpack.c.h.b16 %v368
        %v850 = vunpack.c.l.b16 %v369
        %v851 = vunpack.c.h.b16 %v369
        %v852 = vunpack.c.l.b16 %v370
        %v853 = vunpack.c.h.b16 %v370
        %v854 = vunpack.c.l.b16 %v371
        %v855 = vunpack.c.h.b16 %v371
        %v856 = vunpack.c.l.b16 %v372
        %v857 = vunpack.c.h.b16 %v372
        %v858 = vunpack.c.l.b16 %v373
        %v859 = vunpack.c.h.b16 %v373
        %v860 = vunpack.c.l.b16 %v374
        %v861 = vunpack.c.h.b16 %v374
        %v862 = vunpack.c.l.b16 %v375
        %v863 = vunpack.c.h.b16 %v375
        %v864 = vunpack.c.l.b16 %v376
        %v865 = vunpack.c.h.b16 %v376
        %v866 = vunpack.c.l.b16 %v377
        %v867 = vunpack.c.h.b16 %v377
        %v868 = vunpack.c.l.b16 %v378
        %v869 = vunpack.c.h.b16 %v378
        %v870 = vunpack.c.l.b16 %v379
        %v871 = vunpack.c.h.b16 %v379
        %v872 = vunpack.c.l.b16 %v380
        %v873 = vunpack.c.h.b16 %v380
        %v874 = vunpack.c.l.b16 %v381
        %v875 = vunpack.c.h.b16 %v381
        %v876 = vunpack.c.l.b16 %v382
        %v877 = vunpack.c.h.b16 %v382
        %v878 = vunpack.c.l.b16 %v383
        %v879 = vunpack.c.h.b16 %v383
        %v880 = vunpack.c.l.b16 %v384
        %v881 = vunpack.c.h.b16 %v384
        %v882 = vunpack.c.l.b16 %v385
        %v883 = vunpack.c.h.b16 %v385
        %v884 = vunpack.c.l.b16 %v386
        %v885 = vunpack.c.h.b16 %v386
        %v886 = vunpack.c.l.b16 %v387
        %v887 = vunpack.c.h.b16 %v387
        %v888 = vunpack.c.l.b16 %v388
        %v889 = vunpack.c.h.b16 %v388
        %v890 = vunpack.c.l.b16 %v389
        %v891 = vunpack.c.h.b16 %v389
        %v892 = vunpack.c.l.b16 %v390
        %v893 = vunpack.c.h.b16 %v390
        %v894 = vunpack.c.l.b16 %v391
        %v895 = vunpack.c.h.b16 %v391
        %v896 = vunpack.c.l.b16 %v392
        %v897 = vunpack.c.h.b16 %v392
        %v898 = vunpack.c.l.b16 %v393
        %v899 = vunpack.c.h.b16 %v393
        %v900 = vunpack.c.l.b16 %v394
        %v901 = vunpack.c.h.b16 %v394
        %v902 = vunpack.c.l.b16 %v395
        %v903 = vunpack.c.h.b16 %v395
        %v904 = vunpack.c.l.b16 %v396
        %v905 = vunpack.c.h.b16 %v396
        %v906 = vunpack.c.l.b16 %v397
        %v907 = vunpack.c.h.b16 %v397
        %v908 = vunpack.c.l.b16 %v398
        %v909 = vunpack.c.h.b16 %v398
        %v910 = vunpack.c.l.b16 %v399
        %v911 = vunpack.c.h.b16 %v399
        %v912 = vunpack.c.l.b16 %v400
        %v913 = vunpack.c.h.b16 %v400
        %v914 = vunpack.c.l.b16 %v401
        %v915 = vunpack.c.h.b16 %v401
        %v916 = vunpack.c.l.b16 %v402
        %v917 = vunpack.c.h.b16 %v402
        %v918 = vunpack.c.l.b16 %v403
        %v919 = vunpack.c.h.b16 %v403
        %v920 = vunpack.c.l.b16 %v404
        %v921 = vunpack.c.h.b16 %v404
        %v922 = vunpack.c.l.b16 %v405
        %v923 = vunpack.c.h.b16 %v405
        %v924 = vunpack.c.l.b16 %v406
        %v925 = vunpack.c.h.b16 %v406
        %v926 = vunpack.c.l.b16 %v407
        %v927 = vunpack.c.h.b16 %v407
        %v928 = vunpack.c.l.b16 %v408
        %v929 = vunpack.c.h.b16 %v408
        %v930 = vunpack.c.l.b16 %v409
        %v931 = vunpack.c.h.b16 %v409
        %v932 = vunpack.c.l.b16 %v410
        %v933 = vunpack.c.h.b16 %v410
        %v934 = vunpack.c.l.b16 %v411
        %v935 = vunpack.c.h.b16 %v411
        %v936 = vunpack.c.l.b16 %v412
        %v937 = vunpack.c.h.b16 %v412
        %v938 = vunpack.c.l.b16 %v413
        %v939 = vunpack.c.h.b16 %v413
        %v940 = vunpack.c.l.b16 %v414
        %v941 = vunpack.c.h.b16 %v414
        %v942 = vunpack.c.l.b16 %v415
        %v943 = vunpack.c.h.b16 %v415
        %v944 = vunpack.c.l.b16 %v416
        %v945 = vunpack.c.h.b16 %v416
        %v946 = vunpack.c.l.b16 %v417
        %v947 = vunpack.c.h.b16 %v417
        %v948 = vunpack.c.l.b16 %v418
        %v949 = vunpack.c.h.b16 %v418
        %v950 = vunpack.c.l.b16 %v419
        %v951 = vunpack.c.h.b16 %v419
        %v952 = vunpack.c.l.b16 %v420
        %v953 = vunpack.c.h.b16 %v420
        %v954 = vunpack.c.l.b16 %v421
        %v955 = vunpack.c.h.b16 %v421
        %v956 = vunpack.c.l.b16 %v422
        %v957 = vunpack.c.h.b16 %v422
        %v958 = vunpack.c.l.b16 %v423
        %v959 = vunpack.c.h.b16 %v423
        %v960 = vunpack.c.l.b16 %v424
        %v961 = vunpack.c.h.b16 %v424
        %v962 = vunpack.c.l.b16 %v425
        %v963 = vunpack.c.h.b16 %v425
        %v964 = vunpack.c.l.b16 %v426
        %v965 = vunpack.c.h.b16 %v426
        %v966 = vunpack.c.l.b16 %v427
        %v967 = vunpack.c.h.b16 %v427
        %v968 = vunpack.c.l.b16 %v428
        %v969 = vunpack.c.h.b16 %v428
        %v970 = vunpack.c.l.b16 %v429
        %v971 = vunpack.c.h.b16 %v429
        %v972 = vunpack.c.l.b16 %v430
        %v973 = vunpack.c.h.b16 %v430
        %v974 = vunpack.c.l.b16 %v431
        %v975 = vunpack.c.h.b16 %v431
        %v976 = vunpack.c.l.b16 %v432
        %v977 = vunpack.c.h.b16 %v432
        %v978 = vunpack.c.l.b16 %v433
        %v979 = vunpack.c.h.b16 %v433
        %v980 = vunpack.c.l.b16 %v434
        %v981 = vunpack.c.h.b16 %v434
        %v982 = vunpack.c.l.b16 %v435
        %v983 = vunpack.c.h.b16 %v435
        %v984 = vunpack.c.l.b16 %v436
        %v985 = vunpack.c.h.b16 %v436
        %v986 = vunpack.c.l.b16 %v437
        %v987 = vunpack.c.h.b16 %v437
        %v988 = vunpack.c.l.b16 %v438
        %v989 = vunpack.c.h.b16 %v438
        %v990 = vunpack.c.l.b16 %v439
        %v991 = vunpack.c.h.b16 %v439
        %v992 = vunpack.c.l.b16 %v440
        %v993 = vunpack.c.h.b16 %v440
        %v994 = vunpack.c.l.b16 %v441
        %v995 = vunpack.c.h.b16 %v441
        %v996 = vunpack.c.l.b16 %v442
        %v997 = vunpack.c.h.b16 %v442
        %v998 = vunpack.c.l.b16 %v443
        %v999 = vunpack.c.h.b16 %v443
        %v1000 = vunpack.c.l.b16 %v444
        %v1001 = vunpack.c.h.b16 %v444
        %v1002 = vunpack.c.l.b16 %v445
        %v1003 = vunpack.c.h.b16 %v445
        %v1004 = vunpack.c.l.b16 %v446
        %v1005 = vunpack.c.h.b16 %v446
        %v1006 = vunpack.c.l.b16 %v447
        %v1007 = vunpack.c.h.b16 %v447
        %v1008 = vunpack.c.l.b16 %v448
        %v1009 = vunpack.c.h.b16 %v448
        %v1010 = vunpack.c.l.b16 %v449
        %v1011 = vunpack.c.h.b16 %v449
        %v1012 = vunpack.c.l.b16 %v450
        %v1013 = vunpack.c.h.b16 %v450
        %v1014 = vunpack.c.l.b16 %v451
        %v1015 = vunpack.c.h.b16 %v451
        %v1016 = vunpack.c.l.b16 %v452
        %v1017 = vunpack.c.h.b16 %v452
        %v1018 = vunpack.c.l.b16 %v453
        %v1019 = vunpack.c.h.b16 %v453
        %v1020 = vunpack.c.l.b16 %v454
        %v1021 = vunpack.c.h.b16 %v454
        %v1022 = vunpack.c.l.b16 %v455
        %v1023 = vunpack.c.h.b16 %v455
        %v1024 = vunpack.c.l.b16 %v456
        %v1025 = vunpack.c.h.b16 %v456
        %v1026 = vunpack.c.l.b16 %v457
        %v1027 = vunpack.c.h.b16 %v457
        %v1028 = vunpack.c.l.b16 %v458
        %v1029 = vunpack.c.h.b16 %v458
        %v1030 = vunpack.c.l.b16 %v459
        %v1031 = vunpack.c.h.b16 %v459
        %v1032 = vunpack.c.l.b16 %v460
        %v1033 = vunpack.c.h.b16 %v460
        %v1034 = vunpack.c.l.b16 %v461
        %v1035 = vunpack.c.h.b16 %v461
        %v1036 = vunpack.c.l.b16 %v462
        %v1037 = vunpack.c.h.b16 %v462
        %v1038 = vunpack.c.l.b16 %v463
        %v1039 = vunpack.c.h.b16 %v463
        %v1040 = vunpack.c.l.b16 %v464
        %v1041 = vunpack.c.h.b16 %v464
        %v1042 = vunpack.c.l.b16 %v465
        %v1043 = vunpack.c.h.b16 %v465
        %v1044 = vunpack.c.l.b16 %v466
        %v1045 = vunpack.c.h.b16 %v466
        %v1046 = vunpack.c.l.b16 %v467
        %v1047 = vunpack.c.h.b16 %v467
        %v1048 = vunpack.c.l.b16 %v468
        %v1049 = vunpack.c.h.b16 %v468
        %v1050 = vunpack.c.l.b16 %v469
        %v1051 = vunpack.c.h.b16 %v469
        %v1052 = vunpack.c.l.b16 %v470
        %v1053 = vunpack.c.h.b16 %v470
        %v1054 = vunpack.c.l.b16 %v471
        %v1055 = vunpack.c.h.b16 %v471
        %v1056 = vunpack.c.l.b16 %v472
        %v1057 = vunpack.c.h.b16 %v472
        %v1058 = vunpack.c.l.b16 %v473
        %v1059 = vunpack.c.h.b16 %v473
        %v1060 = vunpack.c.l.b16 %v474
        %v1061 = vunpack.c.h.b16 %v474
        %v1062 = vunpack.c.l.b16 %v475
        %v1063 = vunpack.c.h.b16 %v475
        %v1064 = vunpack.c.l.b16 %v476
        %v1065 = vunpack.c.h.b16 %v476
        %v1066 = vunpack.c.l.b16 %v477
        %v1067 = vunpack.c.h.b16 %v477
        %v1068 = vpack.c.b16 %v690, %v684
        %v1069 = vpack.c.b16 %v691, %v685
        %v1070 = vpack.c.b16 %v692, %v686
        %v1071 = vpack.c.b16 %v693, %v687
        %v1072 = vpack.c.b16 %v694, %v688
        %v1073 = vpack.c.b16 %v695, %v689
        %v1074 = vpack.c.b16 %v702, %v696
        %v1075 = vpack.c.b16 %v703, %v697
        %v1076 = vpack.c.b16 %v704, %v698
        %v1077 = vpack.c.b16 %v705, %v699
        %v1078 = vpack.c.b16 %v706, %v700
        %v1079 = vpack.c.b16 %v707, %v701
        %v1080 = vpack.c.b16 %v714, %v708
        %v1081 = vpack.c.b16 %v715, %v709
        %v1082 = vpack.c.b16 %v716, %v710
        %v1083 = vpack.c.b16 %v717, %v711
        %v1084 = vpack.c.b16 %v718, %v712
        %v1085 = vpack.c.b16 %v719, %v713
        %v1086 = vpack.c.b16 %v726, %v720
        %v1087 = vpack.c.b16 %v727, %v721
        %v1088 = vpack.c.b16 %v728, %v722
        %v1089 = vpack.c.b16 %v729, %v723
        %v1090 = vpack.c.b16 %v730, %v724
        %v1091 = vpack.c.b16 %v731, %v725
        %v1092 = vpack.c.b16 %v738, %v732
        %v1093 = vpack.c.b16 %v739, %v733
        %v1094 = vpack.c.b16 %v740, %v734
        %v1095 = vpack.c.b16 %v741, %v735
        %v1096 = vpack.c.b16 %v742, %v736
        %v1097 = vpack.c.b16 %v743, %v737
        %v1098 = vpack.c.b16 %v750, %v744
        %v1099 = vpack.c.b16 %v751, %v745
        %v1100 = vpack.c.b16 %v752, %v746
        %v1101 = vpack.c.b16 %v753, %v747
        %v1102 = vpack.c.b16 %v754, %v748
        %v1103 = vpack.c.b16 %v755, %v749
        %v1104 = vpack.c.b16 %v762, %v756
        %v1105 = vpack.c.b16 %v763, %v757
        %v1106 = vpack.c.b16 %v764, %v758
        %v1107 = vpack.c.b16 %v765, %v759
        %v1108 = vpack.c.b16 %v766, %v760
        %v1109 = vpack.c.b16 %v767, %v761
        %v1110 = vpack.c.b16 %v774, %v768
        %v1111 = vpack.c.b16 %v775, %v769
        %v1112 = vpack.c.b16 %v776, %v770
        %v1113 = vpack.c.b16 %v777, %v771
        %v1114 = vpack.c.b16 %v778, %v772
        %v1115 = vpack.c.b16 %v779, %v773
        %v1116 = vpack.c.b16 %v786, %v780
        %v1117 = vpack.c.b16 %v787, %v781
        %v1118 = vpack.c.b16 %v788, %v782
        %v1119 = vpack.c.b16 %v789, %v783
        %v1120 = vpack.c.b16 %v790, %v784
        %v1121 = vpack.c.b16 %v791, %v785
        %v1122 = vpack.c.b16 %v798, %v792
        %v1123 = vpack.c.b16 %v799, %v793
        %v1124 = vpack.c.b16 %v800, %v794
        %v1125 = vpack.c.b16 %v801, %v795
        %v1126 = vpack.c.b16 %v802, %v796
        %v1127 = vpack.c.b16 %v803, %v797
        %v1128 = vpack.c.b16 %v810, %v804
        %v1129 = vpack.c.b16 %v811, %v805
        %v1130 = vpack.c.b16 %v812, %v806
        %v1131 = vpack.c.b16 %v813, %v807
        %v1132 = vpack.c.b16 %v814, %v808
        %v1133 = vpack.c.b16 %v815, %v809
        %v1134 = vpack.c.b16 %v822, %v816
        %v1135 = vpack.c.b16 %v823, %v817
        %v1136 = vpack.c.b16 %v824, %v818
        %v1137 = vpack.c.b16 %v825, %v819
        %v1138 = vpack.c.b16 %v826, %v820
        %v1139 = vpack.c.b16 %v827, %v821
        %v1140 = vpack.c.b16 %v834, %v828
        %v1141 = vpack.c.b16 %v835, %v829
        %v1142 = vpack.c.b16 %v836, %v830
        %v1143 = vpack.c.b16 %v837, %v831
        %v1144 = vpack.c.b16 %v838, %v832
        %v1145 = vpack.c.b16 %v839, %v833
        %v1146 = vpack.c.b16 %v846, %v840
        %v1147 = vpack.c.b16 %v847, %v841
        %v1148 = vpack.c.b16 %v848, %v842
        %v1149 = vpack.c.b16 %v849, %v843
        %v1150 = vpack.c.b16 %v850, %v844
        %v1151 = vpack.c.b16 %v851, %v845
        %v1152 = vpack.c.b16 %v858, %v852
        %v1153 = vpack.c.b16 %v859, %v853
        %v1154 = vpack.c.b16 %v860, %v854
        %v1155 = vpack.c.b16 %v861, %v855
        %v1156 = vpack.c.b16 %v862, %v856
        %v1157 = vpack.c.b16 %v863, %v857
        %v1158 = vpack.c.b16 %v870, %v864
        %v1159 = vpack.c.b16 %v871, %v865
        %v1160 = vpack.c.b16 %v872, %v866
        %v1161 = vpack.c.b16 %v873, %v867
        %v1162 = vpack.c.b16 %v874, %v868
        %v1163 = vpack.c.b16 %v875, %v869
        %v1164 = vpack.c.b16 %v882, %v876
        %v1165 = vpack.c.b16 %v883, %v877
        %v1166 = vpack.c.b16 %v884, %v878
        %v1167 = vpack.c.b16 %v885, %v879
        %v1168 = vpack.c.b16 %v886, %v880
        %v1169 = vpack.c.b16 %v887, %v881
        %v1170 = vpack.c.b16 %v894, %v888
        %v1171 = vpack.c.b16 %v895, %v889
        %v1172 = vpack.c.b16 %v896, %v890
        %v1173 = vpack.c.b16 %v897, %v891
        %v1174 = vpack.c.b16 %v898, %v892
        %v1175 = vpack.c.b16 %v899, %v893
        %v1176 = vpack.c.b16 %v906, %v900
        %v1177 = vpack.c.b16 %v907, %v901
        %v1178 = vpack.c.b16 %v908, %v902
        %v1179 = vpack.c.b16 %v909, %v903
        %v1180 = vpack.c.b16 %v910, %v904
        %v1181 = vpack.c.b16 %v911, %v905
        %v1182 = vpack.c.b16 %v918, %v912
        %v1183 = vpack.c.b16 %v919, %v913
        %v1184 = vpack.c.b16 %v920, %v914
        %v1185 = vpack.c.b16 %v921, %v915
        %v1186 = vpack.c.b16 %v922, %v916
        %v1187 = vpack.c.b16 %v923, %v917
        %v1188 = vpack.c.b16 %v930, %v924
        %v1189 = vpack.c.b16 %v931, %v925
        %v1190 = vpack.c.b16 %v932, %v926
        %v1191 = vpack.c.b16 %v933, %v927
        %v1192 = vpack.c.b16 %v934, %v928
        %v1193 = vpack.c.b16 %v935, %v929
        %v1194 = vpack.c.b16 %v942, %v936
        %v1195 = vpack.c.b16 %v943, %v937
        %v1196 = vpack.c.b16 %v944, %v938
        %v1197 = vpack.c.b16 %v945, %v939
        %v1198 = vpack.c.b16 %v946, %v940
        %v1199 = vpack.c.b16 %v947, %v941
        %v1200 = vpack.c.b16 %v954, %v948
        %v1201 = vpack.c.b16 %v955, %v949
        %v1202 = vpack.c.b16 %v956, %v950
        %v1203 = vpack.c.b16 %v957, %v951
        %v1204 = vpack.c.b16 %v958, %v952
        %v1205 = vpack.c.b16 %v959, %v953
        %v1206 = vpack.c.b16 %v966, %v960
        %v1207 = vpack.c.b16 %v967, %v961
        %v1208 = vpack.c.b16 %v968, %v962
        %v1209 = vpack.c.b16 %v969, %v963
        %v1210 = vpack.c.b16 %v970, %v964
        %v1211 = vpack.c.b16 %v971, %v965
        %v1212 = vpack.c.b16 %v978, %v972
        %v1213 = vpack.c.b16 %v979, %v973
        %v1214 = vpack.c.b16 %v980, %v974
        %v1215 = vpack.c.b16 %v981, %v975
        %v1216 = vpack.c.b16 %v982, %v976
        %v1217 = vpack.c.b16 %v983, %v977
        %v1218 = vpack.c.b16 %v990, %v984
        %v1219 = vpack.c.b16 %v991, %v985
        %v1220 = vpack.c.b16 %v992, %v986
        %v1221 = vpack.c.b16 %v993, %v987
        %v1222 = vpack.c.b16 %v994, %v988
        %v1223 = vpack.c.b16 %v995, %v989
        %v1224 = vpack.c.b16 %v1002, %v996
        %v1225 = vpack.c.b16 %v1003, %v997
        %v1226 = vpack.c.b16 %v1004, %v998
        %v1227 = vpack.c.b16 %v1005, %v999
        %v1228 = vpack.c.b16 %v1006, %v1000
        %v1229 = vpack.c.b16 %v1007, %v1001
        %v1230 = vpack.c.b16 %v1014, %v1008
        %v1231 = vpack.c.b16 %v1015, %v1009
        %v1232 = vpack.c.b16 %v1016, %v1010
        %v1233 = vpack.c.b16 %v1017, %v1011
        %v1234 = vpack.c.b16 %v1018, %v1012
        %v1235 = vpack.c.b16 %v1019, %v1013
        %v1236 = vpack.c.b16 %v1026, %v1020
        %v1237 = vpack.c.b16 %v1027, %v1021
        %v1238 = vpack.c.b16 %v1028, %v1022
        %v1239 = vpack.c.b16 %v1029, %v1023
        %v1240 = vpack.c.b16 %v1030, %v1024
        %v1241 = vpack.c.b16 %v1031, %v1025
        %v1242 = vpack.c.b16 %v1038, %v1032
        %v1243 = vpack.c.b16 %v1039, %v1033
        %v1244 = vpack.c.b16 %v1040, %v1034
        %v1245 = vpack.c.b16 %v1041, %v1035
        %v1246 = vpack.c.b16 %v1042, %v1036
        %v1247 = vpack.c.b16 %v1043, %v1037
        %v1248 = vpack.c.b16 %v1050, %v1044
        %v1249 = vpack.c.b16 %v1051, %v1045
        %v1250 = vpack.c.b16 %v1052, %v1046
        %v1251 = vpack.c.b16 %v1053, %v1047
        %v1252 = vpack.c.b16 %v1054, %v1048
        %v1253 = vpack.c.b16 %v1055, %v1049
        %v1254 = vpack.c.b16 %v1062, %v1056
        %v1255 = vpack.c.b16 %v1063, %v1057
        %v1256 = vpack.c.b16 %v1064, %v1058
        %v1257 = vpack.c.b16 %v1065, %v1059
        %v1258 = vpack.c.b16 %v1066, %v1060
        %v1259 = vpack.c.b16 %v1067, %v1061
        %1452 = vmatprep.subr.bf16.mxu0 %v1111
        %1453 = vmatpush1.bf16.msra.mxu0 %v1110
        %1454 = vmatprep.subr.bf16.mxu0 %v1105
        %1455 = vmatpush1.bf16.msra.mxu0 %v1104
        %1456 = vmatprep.subr.bf16.mxu0 %v1099
        %1457 = vmatpush1.bf16.msra.mxu0 %v1098
        %1458 = vmatprep.subr.bf16.mxu0 %v1093
        %1459 = vmatpush1.bf16.msra.mxu0 %v1092
        %1460 = vmatprep.subr.bf16.mxu0 %v1087
        %1461 = vmatpush1.bf16.msra.mxu0 %v1086
        %1462 = vmatprep.subr.bf16.mxu0 %v1081
        %1463 = vmatpush1.bf16.msra.mxu0 %v1080
        %1464 = vmatprep.subr.bf16.mxu0 %v1075
        %1465 = vmatpush1.bf16.msra.mxu0 %v1074
        %1466 = vmatprep.subr.bf16.mxu0 %v1069
        %1467 = vmatpush1.bf16.msra.mxu0 %v1068
        %1468 = vmatprep.subr.bf16.mxu0 %v1159
        %1469 = vmatpush2.bf16.msra.mxu0 %v1158
        %1470 = vmatprep.subr.bf16.mxu0 %v1153
        %1471 = vmatpush2.bf16.msra.mxu0 %v1152
        %1472 = vmatprep.subr.bf16.mxu0 %v1147
        %1473 = vmatpush2.bf16.msra.mxu0 %v1146
        %1474 = vmatprep.subr.bf16.mxu0 %v1141
        %1475 = vmatpush2.bf16.msra.mxu0 %v1140
        %1476 = vmatprep.subr.bf16.mxu0 %v1135
        %1477 = vmatpush2.bf16.msra.mxu0 %v1134
        %1478 = vmatprep.subr.bf16.mxu0 %v1129
        %1479 = vmatpush2.bf16.msra.mxu0 %v1128
        %1480 = vmatprep.subr.bf16.mxu0 %v1123
        %1481 = vmatpush2.bf16.msra.mxu0 %v1122
        %1482 = vmatprep.subr.bf16.mxu0 %v1117
        %1483 = vmatpush2.bf16.msra.mxu0 %v1116
        %1484 = vmatprep.mubr.bf16.mxu0 %v485
        %1485 = vmatmul.mubr.bf16.gmra.mxu0 %v484
        %v1486 = vpop.f32.mrf.mxu0
        %v1487 = vadd.f32 0.0, %v1486
        %v1488 = vpop.f32.mrf.mxu0
        %v1489 = vadd.f32 0.0, %v1488
        %v1490 = vpop.f32.mrf.mxu0
        %v1491 = vpop.f32.mrf.mxu0
        %1492 = vdwg.mxu0
        %1493 = vmatprep.subr.bf16.mxu0 %v1207
        %1494 = vmatpush1.bf16.msra.mxu0 %v1206
        %1495 = vmatprep.subr.bf16.mxu0 %v1201
        %1496 = vmatpush1.bf16.msra.mxu0 %v1200
        %1497 = vmatprep.subr.bf16.mxu0 %v1195
        %1498 = vmatpush1.bf16.msra.mxu0 %v1194
        %1499 = vmatprep.subr.bf16.mxu0 %v1189
        %1500 = vmatpush1.bf16.msra.mxu0 %v1188
        %1501 = vmatprep.subr.bf16.mxu0 %v1183
        %1502 = vmatpush1.bf16.msra.mxu0 %v1182
        %1503 = vmatprep.subr.bf16.mxu0 %v1177
        %1504 = vmatpush1.bf16.msra.mxu0 %v1176
        %1505 = vmatprep.subr.bf16.mxu0 %v1171
        %1506 = vmatpush1.bf16.msra.mxu0 %v1170
        %1507 = vmatprep.subr.bf16.mxu0 %v1165
        %1508 = vmatpush1.bf16.msra.mxu0 %v1164
        %1509 = vmatprep.subr.bf16.mxu0 %v1255
        %1510 = vmatpush2.bf16.msra.mxu0 %v1254
        %1511 = vmatprep.subr.bf16.mxu0 %v1249
        %1512 = vmatpush2.bf16.msra.mxu0 %v1248
        %1513 = vmatprep.subr.bf16.mxu0 %v1243
        %1514 = vmatpush2.bf16.msra.mxu0 %v1242
        %1515 = vmatprep.subr.bf16.mxu0 %v1237
        %1516 = vmatpush2.bf16.msra.mxu0 %v1236
        %1517 = vmatprep.subr.bf16.mxu0 %v1231
        %1518 = vmatpush2.bf16.msra.mxu0 %v1230
        %1519 = vmatprep.subr.bf16.mxu0 %v1225
        %1520 = vmatpush2.bf16.msra.mxu0 %v1224
        %1521 = vmatprep.subr.bf16.mxu0 %v1219
        %1522 = vmatpush2.bf16.msra.mxu0 %v1218
        %1523 = vmatprep.subr.bf16.mxu0 %v1213
        %1524 = vmatpush2.bf16.msra.mxu0 %v1212
        %1525 = vmatprep.mubr.bf16.mxu0 %v487
        %1526 = vmatmul.mubr.bf16.gmra.mxu0 %v486
        %v1527 = vpop.f32.mrf.mxu0
        %v1528 = vadd.f32 %v1487, %v1527
        %v1529 = vpop.f32.mrf.mxu0
        %v1530 = vadd.f32 %v1489, %v1529
        %v1531 = vpop.f32.mrf.mxu0
        %v1532 = vpop.f32.mrf.mxu0
        %1533 = vdwg.mxu0
        %1534 = vmatprep.subr.bf16.mxu0 %v1113
        %1535 = vmatpush1.bf16.msra.mxu0 %v1112
        %1536 = vmatprep.subr.bf16.mxu0 %v1107
        %1537 = vmatpush1.bf16.msra.mxu0 %v1106
        %1538 = vmatprep.subr.bf16.mxu0 %v1101
        %1539 = vmatpush1.bf16.msra.mxu0 %v1100
        %1540 = vmatprep.subr.bf16.mxu0 %v1095
        %1541 = vmatpush1.bf16.msra.mxu0 %v1094
        %1542 = vmatprep.subr.bf16.mxu0 %v1089
        %1543 = vmatpush1.bf16.msra.mxu0 %v1088
        %1544 = vmatprep.subr.bf16.mxu0 %v1083
        %1545 = vmatpush1.bf16.msra.mxu0 %v1082
        %1546 = vmatprep.subr.bf16.mxu0 %v1077
        %1547 = vmatpush1.bf16.msra.mxu0 %v1076
        %1548 = vmatprep.subr.bf16.mxu0 %v1071
        %1549 = vmatpush1.bf16.msra.mxu0 %v1070
        %1550 = vmatprep.subr.bf16.mxu0 %v1161
        %1551 = vmatpush2.bf16.msra.mxu0 %v1160
        %1552 = vmatprep.subr.bf16.mxu0 %v1155
        %1553 = vmatpush2.bf16.msra.mxu0 %v1154
        %1554 = vmatprep.subr.bf16.mxu0 %v1149
        %1555 = vmatpush2.bf16.msra.mxu0 %v1148
        %1556 = vmatprep.subr.bf16.mxu0 %v1143
        %1557 = vmatpush2.bf16.msra.mxu0 %v1142
        %1558 = vmatprep.subr.bf16.mxu0 %v1137
        %1559 = vmatpush2.bf16.msra.mxu0 %v1136
        %1560 = vmatprep.subr.bf16.mxu0 %v1131
        %1561 = vmatpush2.bf16.msra.mxu0 %v1130
        %1562 = vmatprep.subr.bf16.mxu0 %v1125
        %1563 = vmatpush2.bf16.msra.mxu0 %v1124
        %1564 = vmatprep.subr.bf16.mxu0 %v1119
        %1565 = vmatpush2.bf16.msra.mxu0 %v1118
        %1566 = vmatprep.mubr.bf16.mxu0 %v485
        %1567 = vmatmul.mubr.bf16.gmra.mxu0 %v484
        %v1568 = vpop.f32.mrf.mxu0
        %v1569 = vadd.f32 0.0, %v1568
        %v1570 = vpop.f32.mrf.mxu0
        %v1571 = vadd.f32 0.0, %v1570
        %v1572 = vpop.f32.mrf.mxu0
        %v1573 = vpop.f32.mrf.mxu0
        %1574 = vdwg.mxu0
        %1575 = vmatprep.subr.bf16.mxu0 %v1209
        %1576 = vmatpush1.bf16.msra.mxu0 %v1208
        %1577 = vmatprep.subr.bf16.mxu0 %v1203
        %1578 = vmatpush1.bf16.msra.mxu0 %v1202
        %1579 = vmatprep.subr.bf16.mxu0 %v1197
        %1580 = vmatpush1.bf16.msra.mxu0 %v1196
        %1581 = vmatprep.subr.bf16.mxu0 %v1191
        %1582 = vmatpush1.bf16.msra.mxu0 %v1190
        %1583 = vmatprep.subr.bf16.mxu0 %v1185
        %1584 = vmatpush1.bf16.msra.mxu0 %v1184
        %1585 = vmatprep.subr.bf16.mxu0 %v1179
        %1586 = vmatpush1.bf16.msra.mxu0 %v1178
        %1587 = vmatprep.subr.bf16.mxu0 %v1173
        %1588 = vmatpush1.bf16.msra.mxu0 %v1172
        %1589 = vmatprep.subr.bf16.mxu0 %v1167
        %1590 = vmatpush1.bf16.msra.mxu0 %v1166
        %1591 = vmatprep.subr.bf16.mxu0 %v1257
        %1592 = vmatpush2.bf16.msra.mxu0 %v1256
        %1593 = vmatprep.subr.bf16.mxu0 %v1251
        %1594 = vmatpush2.bf16.msra.mxu0 %v1250
        %1595 = vmatprep.subr.bf16.mxu0 %v1245
        %1596 = vmatpush2.bf16.msra.mxu0 %v1244
        %1597 = vmatprep.subr.bf16.mxu0 %v1239
        %1598 = vmatpush2.bf16.msra.mxu0 %v1238
        %1599 = vmatprep.subr.bf16.mxu0 %v1233
        %1600 = vmatpush2.bf16.msra.mxu0 %v1232
        %1601 = vmatprep.subr.bf16.mxu0 %v1227
        %1602 = vmatpush2.bf16.msra.mxu0 %v1226
        %1603 = vmatprep.subr.bf16.mxu0 %v1221
        %1604 = vmatpush2.bf16.msra.mxu0 %v1220
        %1605 = vmatprep.subr.bf16.mxu0 %v1215
        %1606 = vmatpush2.bf16.msra.mxu0 %v1214
        %1607 = vmatprep.mubr.bf16.mxu0 %v487
        %1608 = vmatmul.mubr.bf16.gmra.mxu0 %v486
        %v1609 = vpop.f32.mrf.mxu0
        %v1610 = vadd.f32 %v1569, %v1609
        %v1611 = vpop.f32.mrf.mxu0
        %v1612 = vadd.f32 %v1571, %v1611
        %v1613 = vpop.f32.mrf.mxu0
        %v1614 = vpop.f32.mrf.mxu0
        %1615 = vdwg.mxu0
        %1616 = vmatprep.subr.bf16.mxu0 %v1115
        %1617 = vmatpush1.bf16.msra.mxu0 %v1114
        %1618 = vmatprep.subr.bf16.mxu0 %v1109
        %1619 = vmatpush1.bf16.msra.mxu0 %v1108
        %1620 = vmatprep.subr.bf16.mxu0 %v1103
        %1621 = vmatpush1.bf16.msra.mxu0 %v1102
        %1622 = vmatprep.subr.bf16.mxu0 %v1097
        %1623 = vmatpush1.bf16.msra.mxu0 %v1096
        %1624 = vmatprep.subr.bf16.mxu0 %v1091
        %1625 = vmatpush1.bf16.msra.mxu0 %v1090
        %1626 = vmatprep.subr.bf16.mxu0 %v1085
        %1627 = vmatpush1.bf16.msra.mxu0 %v1084
        %1628 = vmatprep.subr.bf16.mxu0 %v1079
        %1629 = vmatpush1.bf16.msra.mxu0 %v1078
        %1630 = vmatprep.subr.bf16.mxu0 %v1073
        %1631 = vmatpush1.bf16.msra.mxu0 %v1072
        %1632 = vmatprep.subr.bf16.mxu0 %v1163
        %1633 = vmatpush2.bf16.msra.mxu0 %v1162
        %1634 = vmatprep.subr.bf16.mxu0 %v1157
        %1635 = vmatpush2.bf16.msra.mxu0 %v1156
        %1636 = vmatprep.subr.bf16.mxu0 %v1151
        %1637 = vmatpush2.bf16.msra.mxu0 %v1150
        %1638 = vmatprep.subr.bf16.mxu0 %v1145
        %1639 = vmatpush2.bf16.msra.mxu0 %v1144
        %1640 = vmatprep.subr.bf16.mxu0 %v1139
        %1641 = vmatpush2.bf16.msra.mxu0 %v1138
        %1642 = vmatprep.subr.bf16.mxu0 %v1133
        %1643 = vmatpush2.bf16.msra.mxu0 %v1132
        %1644 = vmatprep.subr.bf16.mxu0 %v1127
        %1645 = vmatpush2.bf16.msra.mxu0 %v1126
        %1646 = vmatprep.subr.bf16.mxu0 %v1121
        %1647 = vmatpush2.bf16.msra.mxu0 %v1120
        %1648 = vmatprep.mubr.bf16.mxu0 %v485
        %1649 = vmatmul.mubr.bf16.gmra.mxu0 %v484
        %v1650 = vpop.f32.mrf.mxu0
        %v1651 = vadd.f32 0.0, %v1650
        %v1652 = vpop.f32.mrf.mxu0
        %v1653 = vadd.f32 0.0, %v1652
        %v1654 = vpop.f32.mrf.mxu0
        %v1655 = vpop.f32.mrf.mxu0
        %1656 = vdwg.mxu0
        %1657 = vmatprep.subr.bf16.mxu0 %v1211
        %1658 = vmatpush1.bf16.msra.mxu0 %v1210
        %1659 = vmatprep.subr.bf16.mxu0 %v1205
        %1660 = vmatpush1.bf16.msra.mxu0 %v1204
        %1661 = vmatprep.subr.bf16.mxu0 %v1199
        %1662 = vmatpush1.bf16.msra.mxu0 %v1198
        %1663 = vmatprep.subr.bf16.mxu0 %v1193
        %1664 = vmatpush1.bf16.msra.mxu0 %v1192
        %1665 = vmatprep.subr.bf16.mxu0 %v1187
        %1666 = vmatpush1.bf16.msra.mxu0 %v1186
        %1667 = vmatprep.subr.bf16.mxu0 %v1181
        %1668 = vmatpush1.bf16.msra.mxu0 %v1180
        %1669 = vmatprep.subr.bf16.mxu0 %v1175
        %1670 = vmatpush1.bf16.msra.mxu0 %v1174
        %1671 = vmatprep.subr.bf16.mxu0 %v1169
        %1672 = vmatpush1.bf16.msra.mxu0 %v1168
        %1673 = vmatprep.subr.bf16.mxu0 %v1259
        %1674 = vmatpush2.bf16.msra.mxu0 %v1258
        %1675 = vmatprep.subr.bf16.mxu0 %v1253
        %1676 = vmatpush2.bf16.msra.mxu0 %v1252
        %1677 = vmatprep.subr.bf16.mxu0 %v1247
        %1678 = vmatpush2.bf16.msra.mxu0 %v1246
        %1679 = vmatprep.subr.bf16.mxu0 %v1241
        %1680 = vmatpush2.bf16.msra.mxu0 %v1240
        %1681 = vmatprep.subr.bf16.mxu0 %v1235
        %1682 = vmatpush2.bf16.msra.mxu0 %v1234
        %1683 = vmatprep.subr.bf16.mxu0 %v1229
        %1684 = vmatpush2.bf16.msra.mxu0 %v1228
        %1685 = vmatprep.subr.bf16.mxu0 %v1223
        %1686 = vmatpush2.bf16.msra.mxu0 %v1222
        %1687 = vmatprep.subr.bf16.mxu0 %v1217
        %1688 = vmatpush2.bf16.msra.mxu0 %v1216
        %1689 = vmatprep.mubr.bf16.mxu0 %v487
        %1690 = vmatmul.mubr.bf16.gmra.mxu0 %v486
        %v1691 = vpop.f32.mrf.mxu0
        %v1692 = vadd.f32 %v1651, %v1691
        %v1693 = vpop.f32.mrf.mxu0
        %v1694 = vadd.f32 %v1653, %v1693
        %v1695 = vpop.f32.mrf.mxu0
        %v1696 = vpop.f32.mrf.mxu0
        %1697 = vdwg.mxu0
        %v1698 = vadd.f32 %v1528, %v1530
        %v1699 = vadd.f32 %v1698, %v1610
        %v1700 = vadd.f32 %v1699, %v1612
        %v1701 = vadd.f32 %v1700, %v1692
        %v1702 = vadd.f32 %v1701, %v1694
        %1703 = vadd.xlane.f32.xlu0 %v1702
        %v1704 = vpop.xlane.xlu0 %1703
        %v1705 = vrcp.pop 768.0
        %v1706 = vmul.f32 %v1704, %v1705
        %v1707 = vsub.f32 %v1528, %v1706
        %v1708 = vsub.f32 %v1530, %v1706
        %v1709 = vsub.f32 %v1610, %v1706
        %v1710 = vsub.f32 %v1612, %v1706
        %v1711 = vsub.f32 %v1692, %v1706
        %v1712 = vsub.f32 %v1694, %v1706
        %v1713 = vmul.f32 %v1707, %v1707
        %v1714 = vmul.f32 %v1708, %v1708
        %v1715 = vmul.f32 %v1709, %v1709
        %v1716 = vmul.f32 %v1710, %v1710
        %v1717 = vmul.f32 %v1711, %v1711
        %v1718 = vmul.f32 %v1712, %v1712
        %v1719 = vadd.f32 %v1713, %v1714
        %v1720 = vadd.f32 %v1719, %v1715
        %v1721 = vadd.f32 %v1720, %v1716
        %v1722 = vadd.f32 %v1721, %v1717
        %v1723 = vadd.f32 %v1722, %v1718
        %1724 = vadd.xlane.f32.xlu0 %v1723
        %v1725 = vpop.xlane.xlu0 %1724
        %v1726 = vmul.f32 %v1725, %v1705
        %v1727 = vadd.f32 %v1726, 1e-05
        %v1728 = vrsqrt.pop %v1727
        %v1729 = vmul.f32 %v1707, %v1728
        %v1730 = vmul.f32 %v1708, %v1728
        %v1731 = vmul.f32 %v1709, %v1728
        %v1732 = vmul.f32 %v1710, %v1728
        %v1733 = vmul.f32 %v1711, %v1728
        %v1734 = vmul.f32 %v1712, %v1728
        %v1735 = vld [vmem:[#allocation2] sm:$0x3f]
        %v1736 = vrot.slane %v1729, 4
        %v1737 = vadd.f32 %v1729, %v1736
        %v1738 = vrot.slane %v1737, 2
        %v1739 = vadd.f32 %v1737, %v1738
        %v1740 = vrot.slane %v1739, 1
        %v1741 = vadd.f32 %v1739, %v1740
        %v1742 = vrot.slane %v1730, 4
        %v1743 = vadd.f32 %v1730, %v1742
        %v1744 = vrot.slane %v1743, 2
        %v1745 = vadd.f32 %v1743, %v1744
        %v1746 = vrot.slane %v1745, 1
        %v1747 = vadd.f32 %v1745, %v1746
        %v1748 = vrot.slane %v1731, 4
        %v1749 = vadd.f32 %v1731, %v1748
        %v1750 = vrot.slane %v1749, 2
        %v1751 = vadd.f32 %v1749, %v1750
        %v1752 = vrot.slane %v1751, 1
        %v1753 = vadd.f32 %v1751, %v1752
        %v1754 = vrot.slane %v1732, 4
        %v1755 = vadd.f32 %v1732, %v1754
        %v1756 = vrot.slane %v1755, 2
        %v1757 = vadd.f32 %v1755, %v1756
        %v1758 = vrot.slane %v1757, 1
        %v1759 = vadd.f32 %v1757, %v1758
        %v1760 = vrot.slane %v1733, 4
        %v1761 = vadd.f32 %v1733, %v1760
        %v1762 = vrot.slane %v1761, 2
        %v1763 = vadd.f32 %v1761, %v1762
        %v1764 = vrot.slane %v1763, 1
        %v1765 = vadd.f32 %v1763, %v1764
        %v1766 = vrot.slane %v1734, 4
        %v1767 = vadd.f32 %v1734, %v1766
        %v1768 = vrot.slane %v1767, 2
        %v1769 = vadd.f32 %v1767, %v1768
        %v1770 = vrot.slane %v1769, 1
        %v1771 = vadd.f32 %v1769, %v1770
        %v1778 = vcombine.low %v1741, %v1747
        %v1779 = vcombine.low %v1753, %v1759
        %v1780 = vcombine.low %v1765, %v1771
        %v1782 = vunpack.c.l.s4 1966171168
        %v1783 = vunpack.c.0.s8 %v1782
        %v1784 = vlaneseq
        %v1785 = vshrl.u32 %v1784, 7
        %v1786 = vsub.s32 %v1783, %v1785
        %v1787 = vrot.slane %v1778, %v1786
        %v1789 = vunpack.c.l.s4 1966171168
        %v1790 = vunpack.c.0.s8 %v1789
        %v1791 = vlaneseq
        %v1792 = vshrl.u32 %v1791, 7
        %v1793 = vsub.s32 %v1790, %v1792
        %v1794 = vrot.slane %v1779, %v1793
        %v1796 = vunpack.c.l.s4 1966171168
        %v1797 = vunpack.c.0.s8 %v1796
        %v1798 = vlaneseq
        %v1799 = vshrl.u32 %v1798, 7
        %v1800 = vsub.s32 %v1797, %v1799
        %v1801 = vrot.slane %v1780, %v1800
        %v1802 = vcombine.low %v1787, %v1794
        %v1804 = vunpack.c.l.s4 1966171168
        %v1805 = vunpack.c.0.s8 %v1804
        %v1806 = vlaneseq
        %v1807 = vshrl.u32 %v1806, 7
        %v1808 = vsub.s32 %v1805, %v1807
        %v1809 = vrot.slane %v1802, %v1808
        %v1811 = vunpack.c.l.s4 1966171168
        %v1812 = vunpack.c.0.s8 %v1811
        %v1813 = vlaneseq
        %v1814 = vshrl.u32 %v1813, 7
        %v1815 = vsub.s32 %v1812, %v1814
        %v1816 = vrot.slane %v1801, %v1815
        %v1817 = vcombine.low %v1809, %v1816
        %v1819 = vadd.f32 %v1735, %v1817
        %v1820 = vlaneseq
        %vm1821 = vcmp.ge.s32.totalorder %v1820, 0
        %vm1822 = vcmp.lt.s32.totalorder %v1820, 768
        %vm1823 = vmand %vm1821, %vm1822
        %1824 = vst.msk [vmem:[#allocation2] sm:$0x3f] %vm1823, %v1819
        // Predicated region
        $region49: #{smit_classifier_forward.1} parent=43 // pred_check
          %p1825 = pneg %p275
        $region50: #{smit_classifier_forward.1} parent=43 // pred_check_branch
          %1827 = sbr.rel (%p1825) target = $region52
        $region51: #{smit_classifier_forward.1} parent=43 // pred_region
          %v1828 = vld [vmem:[%s2] sm:$0x3f]
          %v1829 = vld [vmem:[#allocation2] sm:$0x3f]
          %v1830 = vmul.f32 %v1829, 0.125
          %v1831 = vmul.f32 %v1828, %v1830
          %v1832 = vld [vmem:[%s3] sm:$0x3f]
          %v1833 = vadd.f32 %v1831, %v1832
          %v1834 = vld [vmem:[%s4] sm:$0xff]
          %v1835 = vld [vmem:[%s4 + $0x8] sm:$0xff]
          %v1836 = vld [vmem:[%s4 + $0x10] sm:$0xff]
          %v1837 = vld [vmem:[%s4 + $0x18] sm:$0xff]
          %v1838 = vld [vmem:[%s4 + $0x20] sm:$0xff]
          %v1839 = vld [vmem:[%s4 + $0x28] sm:$0xff]
          %v1840 = vld [vmem:[%s4 + $0x30] sm:$0xff]
          %v1841 = vld [vmem:[%s4 + $0x38] sm:$0xff]
          %v1842 = vld [vmem:[%s4 + $0x40] sm:$0xff]
          %v1843 = vld [vmem:[%s4 + $0x48] sm:$0xff]
          %v1844 = vld [vmem:[%s4 + $0x50] sm:$0xff]
          %v1845 = vld [vmem:[%s4 + $0x58] sm:$0xff]
          %v1846 = vld [vmem:[%s4 + $0x60] sm:$0xff]
          %v1847 = vld [vmem:[%s4 + $0x68] sm:$0xff]
          %v1848 = vld [vmem:[%s4 + $0x70] sm:$0xff]
          %v1849 = vld [vmem:[%s4 + $0x78] sm:$0xff]
          %v1850 = vld [vmem:[%s4 + $0x80] sm:$0xff]
          %v1851 = vld [vmem:[%s4 + $0x88] sm:$0xff]
          %v1852 = vld [vmem:[%s4 + $0x90] sm:$0xff]
          %v1853 = vld [vmem:[%s4 + $0x98] sm:$0xff]
          %v1854 = vld [vmem:[%s4 + $0xa0] sm:$0xff]
          %v1855 = vld [vmem:[%s4 + $0xa8] sm:$0xff]
          %v1856 = vld [vmem:[%s4 + $0xb0] sm:$0xff]
          %v1857 = vld [vmem:[%s4 + $0xb8] sm:$0xff]
          %v1858 = vld [vmem:[%s4 + $0xc0] sm:$0xff]
          %v1859 = vld [vmem:[%s4 + $0xc8] sm:$0xff]
          %v1860 = vld [vmem:[%s4 + $0xd0] sm:$0xff]
          %v1861 = vld [vmem:[%s4 + $0xd8] sm:$0xff]
          %v1862 = vld [vmem:[%s4 + $0xe0] sm:$0xff]
          %v1863 = vld [vmem:[%s4 + $0xe8] sm:$0xff]
          %v1864 = vld [vmem:[%s4 + $0xf0] sm:$0xff]
          %v1865 = vld [vmem:[%s4 + $0xf8] sm:$0xff]
          %v1866 = vld [vmem:[%s4 + $0x100] sm:$0xff]
          %v1867 = vld [vmem:[%s4 + $0x108] sm:$0xff]
          %v1868 = vld [vmem:[%s4 + $0x110] sm:$0xff]
          %v1869 = vld [vmem:[%s4 + $0x118] sm:$0xff]
          %v1870 = vld [vmem:[%s4 + $0x120] sm:$0xff]
          %v1871 = vld [vmem:[%s4 + $0x128] sm:$0xff]
          %v1872 = vld [vmem:[%s4 + $0x130] sm:$0xff]
          %v1873 = vld [vmem:[%s4 + $0x138] sm:$0xff]
          %v1874 = vld [vmem:[%s4 + $0x140] sm:$0xff]
          %v1875 = vld [vmem:[%s4 + $0x148] sm:$0xff]
          %v1876 = vld [vmem:[%s4 + $0x150] sm:$0xff]
          %v1877 = vld [vmem:[%s4 + $0x158] sm:$0xff]
          %v1878 = vld [vmem:[%s4 + $0x160] sm:$0xff]
          %v1879 = vld [vmem:[%s4 + $0x168] sm:$0xff]
          %v1880 = vld [vmem:[%s4 + $0x170] sm:$0xff]
          %v1881 = vld [vmem:[%s4 + $0x178] sm:$0xff]
          %v1882 = vld [vmem:[%s4 + $0x180] sm:$0xff]
          %v1883 = vld [vmem:[%s4 + $0x188] sm:$0xff]
          %v1884 = vld [vmem:[%s4 + $0x190] sm:$0xff]
          %v1885 = vld [vmem:[%s4 + $0x198] sm:$0xff]
          %v1886 = vld [vmem:[%s4 + $0x1a0] sm:$0xff]
          %v1887 = vld [vmem:[%s4 + $0x1a8] sm:$0xff]
          %v1888 = vld [vmem:[%s4 + $0x1b0] sm:$0xff]
          %v1889 = vld [vmem:[%s4 + $0x1b8] sm:$0xff]
          %v1890 = vld [vmem:[%s4 + $0x1c0] sm:$0xff]
          %v1891 = vld [vmem:[%s4 + $0x1c8] sm:$0xff]
          %v1892 = vld [vmem:[%s4 + $0x1d0] sm:$0xff]
          %v1893 = vld [vmem:[%s4 + $0x1d8] sm:$0xff]
          %v1894 = vld [vmem:[%s4 + $0x1e0] sm:$0xff]
          %v1895 = vld [vmem:[%s4 + $0x1e8] sm:$0xff]
          %v1896 = vld [vmem:[%s4 + $0x1f0] sm:$0xff]
          %v1897 = vld [vmem:[%s4 + $0x1f8] sm:$0xff]
          %v1898 = vld [vmem:[%s4 + $0x200] sm:$0xff]
          %v1899 = vld [vmem:[%s4 + $0x208] sm:$0xff]
          %v1900 = vld [vmem:[%s4 + $0x210] sm:$0xff]
          %v1901 = vld [vmem:[%s4 + $0x218] sm:$0xff]
          %v1902 = vld [vmem:[%s4 + $0x220] sm:$0xff]
          %v1903 = vld [vmem:[%s4 + $0x228] sm:$0xff]
          %v1904 = vld [vmem:[%s4 + $0x230] sm:$0xff]
          %v1905 = vld [vmem:[%s4 + $0x238] sm:$0xff]
          %v1906 = vld [vmem:[%s4 + $0x240] sm:$0xff]
          %v1907 = vld [vmem:[%s4 + $0x248] sm:$0xff]
          %v1908 = vld [vmem:[%s4 + $0x250] sm:$0xff]
          %v1909 = vld [vmem:[%s4 + $0x258] sm:$0xff]
          %v1910 = vld [vmem:[%s4 + $0x260] sm:$0xff]
          %v1911 = vld [vmem:[%s4 + $0x268] sm:$0xff]
          %v1912 = vld [vmem:[%s4 + $0x270] sm:$0xff]
          %v1913 = vld [vmem:[%s4 + $0x278] sm:$0xff]
          %v1914 = vld [vmem:[%s4 + $0x280] sm:$0xff]
          %v1915 = vld [vmem:[%s4 + $0x288] sm:$0xff]
          %v1916 = vld [vmem:[%s4 + $0x290] sm:$0xff]
          %v1917 = vld [vmem:[%s4 + $0x298] sm:$0xff]
          %v1918 = vld [vmem:[%s4 + $0x2a0] sm:$0xff]
          %v1919 = vld [vmem:[%s4 + $0x2a8] sm:$0xff]
          %v1920 = vld [vmem:[%s4 + $0x2b0] sm:$0xff]
          %v1921 = vld [vmem:[%s4 + $0x2b8] sm:$0xff]
          %v1922 = vld [vmem:[%s4 + $0x2c0] sm:$0xff]
          %v1923 = vld [vmem:[%s4 + $0x2c8] sm:$0xff]
          %v1924 = vld [vmem:[%s4 + $0x2d0] sm:$0xff]
          %v1925 = vld [vmem:[%s4 + $0x2d8] sm:$0xff]
          %v1926 = vld [vmem:[%s4 + $0x2e0] sm:$0xff]
          %v1927 = vld [vmem:[%s4 + $0x2e8] sm:$0xff]
          %v1928 = vld [vmem:[%s4 + $0x2f0] sm:$0xff]
          %v1929 = vld [vmem:[%s4 + $0x2f8] sm:$0xff]
          %v1930 = vld [vmem:[%s5] sm:$0x1]
          %v1932 = vlaneseq
          %v1933 = vshrl.u32 %v1932, 7
          %v1934 = vsub.s32 0, %v1933
          %v1935 = vrot.slane %v1833, %v1934
          %v1936 = vlaneseq
          %v1937 = vshrl.u32 %v1936, 7
          %v1938 = vsub.s32 1, %v1937
          %v1939 = vrot.slane %v1833, %v1938
          %v1940 = vlaneseq
          %v1941 = vshrl.u32 %v1940, 7
          %v1942 = vsub.s32 2, %v1941
          %v1943 = vrot.slane %v1833, %v1942
          %v1944 = vlaneseq
          %v1945 = vshrl.u32 %v1944, 7
          %v1946 = vsub.s32 3, %v1945
          %v1947 = vrot.slane %v1833, %v1946
          %v1948 = vlaneseq
          %v1949 = vshrl.u32 %v1948, 7
          %v1950 = vsub.s32 4, %v1949
          %v1951 = vrot.slane %v1833, %v1950
          %v1952 = vlaneseq
          %v1953 = vshrl.u32 %v1952, 7
          %v1954 = vsub.s32 5, %v1953
          %v1955 = vrot.slane %v1833, %v1954
          %1962 = vmatprep.subr.mxu0 0.0
          %1963 = vmatpush1.msra.mxu0 %v1849
          %1964 = vmatprep.subr.mxu0 0.0
          %1965 = vmatpush1.msra.mxu0 %v1848
          %1966 = vmatprep.subr.mxu0 0.0
          %1967 = vmatpush1.msra.mxu0 %v1847
          %1968 = vmatprep.subr.mxu0 0.0
          %1969 = vmatpush1.msra.mxu0 %v1846
          %1970 = vmatprep.subr.mxu0 0.0
          %1971 = vmatpush1.msra.mxu0 %v1845
          %1972 = vmatprep.subr.mxu0 0.0
          %1973 = vmatpush1.msra.mxu0 %v1844
          %1974 = vmatprep.subr.mxu0 0.0
          %1975 = vmatpush1.msra.mxu0 %v1843
          %1976 = vmatprep.subr.mxu0 0.0
          %1977 = vmatpush1.msra.mxu0 %v1842
          %1978 = vmatprep.subr.mxu0 0.0
          %1979 = vmatpush1.msra.mxu0 %v1841
          %1980 = vmatprep.subr.mxu0 0.0
          %1981 = vmatpush1.msra.mxu0 %v1840
          %1982 = vmatprep.subr.mxu0 0.0
          %1983 = vmatpush1.msra.mxu0 %v1839
          %1984 = vmatprep.subr.mxu0 0.0
          %1985 = vmatpush1.msra.mxu0 %v1838
          %1986 = vmatprep.subr.mxu0 0.0
          %1987 = vmatpush1.msra.mxu0 %v1837
          %1988 = vmatprep.subr.mxu0 0.0
          %1989 = vmatpush1.msra.mxu0 %v1836
          %1990 = vmatprep.subr.mxu0 0.0
          %1991 = vmatpush1.msra.mxu0 %v1835
          %1992 = vmatprep.subr.mxu0 0.0
          %1993 = vmatpush1.msra.mxu0 %v1834
          %1994 = vmatprep.subr.mxu0 0.0
          %1995 = vmatpush2.msra.mxu0 %v1865
          %1996 = vmatprep.subr.mxu0 0.0
          %1997 = vmatpush2.msra.mxu0 %v1864
          %1998 = vmatprep.subr.mxu0 0.0
          %1999 = vmatpush2.msra.mxu0 %v1863
          %2000 = vmatprep.subr.mxu0 0.0
          %2001 = vmatpush2.msra.mxu0 %v1862
          %2002 = vmatprep.subr.mxu0 0.0
          %2003 = vmatpush2.msra.mxu0 %v1861
          %2004 = vmatprep.subr.mxu0 0.0
          %2005 = vmatpush2.msra.mxu0 %v1860
          %2006 = vmatprep.subr.mxu0 0.0
          %2007 = vmatpush2.msra.mxu0 %v1859
          %2008 = vmatprep.subr.mxu0 0.0
          %2009 = vmatpush2.msra.mxu0 %v1858
          %2010 = vmatprep.subr.mxu0 0.0
          %2011 = vmatpush2.msra.mxu0 %v1857
          %2012 = vmatprep.subr.mxu0 0.0
          %2013 = vmatpush2.msra.mxu0 %v1856
          %2014 = vmatprep.subr.mxu0 0.0
          %2015 = vmatpush2.msra.mxu0 %v1855
          %2016 = vmatprep.subr.mxu0 0.0
          %2017 = vmatpush2.msra.mxu0 %v1854
          %2018 = vmatprep.subr.mxu0 0.0
          %2019 = vmatpush2.msra.mxu0 %v1853
          %2020 = vmatprep.subr.mxu0 0.0
          %2021 = vmatpush2.msra.mxu0 %v1852
          %2022 = vmatprep.subr.mxu0 0.0
          %2023 = vmatpush2.msra.mxu0 %v1851
          %2024 = vmatprep.subr.mxu0 0.0
          %2025 = vmatpush2.msra.mxu0 %v1850
          %2026 = vmatprep.mubr.f32.mxu0 %v1939
          %2027 = vmatmul.mubr.f32.gmra.mxu0 %v1935
          %v2028 = vpop.f32.mrf.mxu0
          %v2029 = vadd.f32 %v1930, %v2028
          %v2030 = vpop.f32.mrf.mxu0
          %2031 = vdwg.mxu0
          %2032 = vmatprep.subr.mxu0 0.0
          %2033 = vmatpush1.msra.mxu0 %v1881
          %2034 = vmatprep.subr.mxu0 0.0
          %2035 = vmatpush1.msra.mxu0 %v1880
          %2036 = vmatprep.subr.mxu0 0.0
          %2037 = vmatpush1.msra.mxu0 %v1879
          %2038 = vmatprep.subr.mxu0 0.0
          %2039 = vmatpush1.msra.mxu0 %v1878
          %2040 = vmatprep.subr.mxu0 0.0
          %2041 = vmatpush1.msra.mxu0 %v1877
          %2042 = vmatprep.subr.mxu0 0.0
          %2043 = vmatpush1.msra.mxu0 %v1876
          %2044 = vmatprep.subr.mxu0 0.0
          %2045 = vmatpush1.msra.mxu0 %v1875
          %2046 = vmatprep.subr.mxu0 0.0
          %2047 = vmatpush1.msra.mxu0 %v1874
          %2048 = vmatprep.subr.mxu0 0.0
          %2049 = vmatpush1.msra.mxu0 %v1873
          %2050 = vmatprep.subr.mxu0 0.0
          %2051 = vmatpush1.msra.mxu0 %v1872
          %2052 = vmatprep.subr.mxu0 0.0
          %2053 = vmatpush1.msra.mxu0 %v1871
          %2054 = vmatprep.subr.mxu0 0.0
          %2055 = vmatpush1.msra.mxu0 %v1870
          %2056 = vmatprep.subr.mxu0 0.0
          %2057 = vmatpush1.msra.mxu0 %v1869
          %2058 = vmatprep.subr.mxu0 0.0
          %2059 = vmatpush1.msra.mxu0 %v1868
          %2060 = vmatprep.subr.mxu0 0.0
          %2061 = vmatpush1.msra.mxu0 %v1867
          %2062 = vmatprep.subr.mxu0 0.0
          %2063 = vmatpush1.msra.mxu0 %v1866
          %2064 = vmatprep.subr.mxu0 0.0
          %2065 = vmatpush2.msra.mxu0 %v1897
          %2066 = vmatprep.subr.mxu0 0.0
          %2067 = vmatpush2.msra.mxu0 %v1896
          %2068 = vmatprep.subr.mxu0 0.0
          %2069 = vmatpush2.msra.mxu0 %v1895
          %2070 = vmatprep.subr.mxu0 0.0
          %2071 = vmatpush2.msra.mxu0 %v1894
          %2072 = vmatprep.subr.mxu0 0.0
          %2073 = vmatpush2.msra.mxu0 %v1893
          %2074 = vmatprep.subr.mxu0 0.0
          %2075 = vmatpush2.msra.mxu0 %v1892
          %2076 = vmatprep.subr.mxu0 0.0
          %2077 = vmatpush2.msra.mxu0 %v1891
          %2078 = vmatprep.subr.mxu0 0.0
          %2079 = vmatpush2.msra.mxu0 %v1890
          %2080 = vmatprep.subr.mxu0 0.0
          %2081 = vmatpush2.msra.mxu0 %v1889
          %2082 = vmatprep.subr.mxu0 0.0
          %2083 = vmatpush2.msra.mxu0 %v1888
          %2084 = vmatprep.subr.mxu0 0.0
          %2085 = vmatpush2.msra.mxu0 %v1887
          %2086 = vmatprep.subr.mxu0 0.0
          %2087 = vmatpush2.msra.mxu0 %v1886
          %2088 = vmatprep.subr.mxu0 0.0
          %2089 = vmatpush2.msra.mxu0 %v1885
          %2090 = vmatprep.subr.mxu0 0.0
          %2091 = vmatpush2.msra.mxu0 %v1884
          %2092 = vmatprep.subr.mxu0 0.0
          %2093 = vmatpush2.msra.mxu0 %v1883
          %2094 = vmatprep.subr.mxu0 0.0
          %2095 = vmatpush2.msra.mxu0 %v1882
          %2096 = vmatprep.mubr.f32.mxu0 %v1947
          %2097 = vmatmul.mubr.f32.gmra.mxu0 %v1943
          %v2098 = vpop.f32.mrf.mxu0
          %v2099 = vadd.f32 %v2029, %v2098
          %v2100 = vpop.f32.mrf.mxu0
          %2101 = vdwg.mxu0
          %2102 = vmatprep.subr.mxu0 0.0
          %2103 = vmatpush1.msra.mxu0 %v1913
          %2104 = vmatprep.subr.mxu0 0.0
          %2105 = vmatpush1.msra.mxu0 %v1912
          %2106 = vmatprep.subr.mxu0 0.0
          %2107 = vmatpush1.msra.mxu0 %v1911
          %2108 = vmatprep.subr.mxu0 0.0
          %2109 = vmatpush1.msra.mxu0 %v1910
          %2110 = vmatprep.subr.mxu0 0.0
          %2111 = vmatpush1.msra.mxu0 %v1909
          %2112 = vmatprep.subr.mxu0 0.0
          %2113 = vmatpush1.msra.mxu0 %v1908
          %2114 = vmatprep.subr.mxu0 0.0
          %2115 = vmatpush1.msra.mxu0 %v1907
          %2116 = vmatprep.subr.mxu0 0.0
          %2117 = vmatpush1.msra.mxu0 %v1906
          %2118 = vmatprep.subr.mxu0 0.0
          %2119 = vmatpush1.msra.mxu0 %v1905
          %2120 = vmatprep.subr.mxu0 0.0
          %2121 = vmatpush1.msra.mxu0 %v1904
          %2122 = vmatprep.subr.mxu0 0.0
          %2123 = vmatpush1.msra.mxu0 %v1903
          %2124 = vmatprep.subr.mxu0 0.0
          %2125 = vmatpush1.msra.mxu0 %v1902
          %2126 = vmatprep.subr.mxu0 0.0
          %2127 = vmatpush1.msra.mxu0 %v1901
          %2128 = vmatprep.subr.mxu0 0.0
          %2129 = vmatpush1.msra.mxu0 %v1900
          %2130 = vmatprep.subr.mxu0 0.0
          %2131 = vmatpush1.msra.mxu0 %v1899
          %2132 = vmatprep.subr.mxu0 0.0
          %2133 = vmatpush1.msra.mxu0 %v1898
          %2134 = vmatprep.subr.mxu0 0.0
          %2135 = vmatpush2.msra.mxu0 %v1929
          %2136 = vmatprep.subr.mxu0 0.0
          %2137 = vmatpush2.msra.mxu0 %v1928
          %2138 = vmatprep.subr.mxu0 0.0
          %2139 = vmatpush2.msra.mxu0 %v1927
          %2140 = vmatprep.subr.mxu0 0.0
          %2141 = vmatpush2.msra.mxu0 %v1926
          %2142 = vmatprep.subr.mxu0 0.0
          %2143 = vmatpush2.msra.mxu0 %v1925
          %2144 = vmatprep.subr.mxu0 0.0
          %2145 = vmatpush2.msra.mxu0 %v1924
          %2146 = vmatprep.subr.mxu0 0.0
          %2147 = vmatpush2.msra.mxu0 %v1923
          %2148 = vmatprep.subr.mxu0 0.0
          %2149 = vmatpush2.msra.mxu0 %v1922
          %2150 = vmatprep.subr.mxu0 0.0
          %2151 = vmatpush2.msra.mxu0 %v1921
          %2152 = vmatprep.subr.mxu0 0.0
          %2153 = vmatpush2.msra.mxu0 %v1920
          %2154 = vmatprep.subr.mxu0 0.0
          %2155 = vmatpush2.msra.mxu0 %v1919
          %2156 = vmatprep.subr.mxu0 0.0
          %2157 = vmatpush2.msra.mxu0 %v1918
          %2158 = vmatprep.subr.mxu0 0.0
          %2159 = vmatpush2.msra.mxu0 %v1917
          %2160 = vmatprep.subr.mxu0 0.0
          %2161 = vmatpush2.msra.mxu0 %v1916
          %2162 = vmatprep.subr.mxu0 0.0
          %2163 = vmatpush2.msra.mxu0 %v1915
          %2164 = vmatprep.subr.mxu0 0.0
          %2165 = vmatpush2.msra.mxu0 %v1914
          %2166 = vmatprep.mubr.f32.mxu0 %v1955
          %2167 = vmatmul.mubr.f32.gmra.mxu0 %v1951
          %v2168 = vpop.f32.mrf.mxu0
          %v2169 = vadd.f32 %v2099, %v2168
          %v2170 = vpop.f32.mrf.mxu0
          %2171 = vdwg.mxu0
          %2172 = vst [vmem:[%s265] sm:$0x1] %v2169
        $region52: #{smit_classifier_forward.1} parent=43 // pred_fallthru
          _
        %s2173 = sand.u32 %s173, 1
        %s2174 = scalar_lea.sflag [#allocation4], %s2173
        %s2175 = sand.u32 %s173, 1
        %s2176 = scalar_lea.vmem [#allocation3], %s2175
        // Predicated region
        $region53: #{smit_classifier_forward.1} parent=43 // pred_check
          %p2177 = pneg %p183
        $region54: #{smit_classifier_forward.1} parent=43 // pred_check_branch
          %2179 = sbr.rel (%p2177) target = $region56
        $region55: #{smit_classifier_forward.1} parent=43 // pred_region
          %s2181 = ssub.s32 16, 16
          %2182 = vsyncadd %s2174, %s2181
          %s2183 = smul.addr %s24, 16
          %s2184 = scalar_lea.hbm %s6, %s2183
          %s2186 = sshll.u32 %s2176, 4
          %s2187 = int_to_ptr.vmem [resolvable:$true] %s2186
          %2189 = dma.vmem_to_hbm [thread:$0]  %s2187, 16, %s2184, %s2174
        $region56: #{smit_classifier_forward.1} parent=43 // pred_fallthru
          _
      $region44: #{smit_classifier_forward.1} parent=5 // pred_fallthru
        _
      %p2190 = scmp.le.s32.totalorder 2, %s15
      // Predicated region
      $region57: #{smit_classifier_forward.1} parent=5 // pred_check
        %p2191 = pneg %p2190
      $region58: #{smit_classifier_forward.1} parent=5 // pred_check_branch
        %2193 = sbr.rel (%p2191) target = $region60
      $region59: #{smit_classifier_forward.1} parent=5 // pred_region
        %s2194 = ssub.s32 %s15, 2
        // Predicated region
        $region61: #{smit_classifier_forward.1} parent=59 // pred_check
          %p2195 = pneg %p189
        $region62: #{smit_classifier_forward.1} parent=59 // pred_check_branch
          %2197 = sbr.rel (%p2195) target = $region64
        $region63: #{smit_classifier_forward.1} parent=59 // pred_region
          %s2198 = sand.u32 %s174, 1
          %s2199 = scalar_lea.sflag [#allocation4], %s2198
          %s2200 = sand.u32 %s174, 1
          %s2201 = scalar_lea.vmem [#allocation3], %s2200
          %2202 = dma.done %s2199, 16
        $region64: #{smit_classifier_forward.1} parent=59 // pred_fallthru
          _
      $region60: #{smit_classifier_forward.1} parent=5 // pred_fallthru
        _
    $region6: #{smit_classifier_forward.1} parent=1 // loop_footer
      %s19 = sadd.s32 1, %s15
    $region7: #{smit_classifier_forward.1} parent=1 // loop_footer_branch
      %14 = sbr.rel target = $region3
    $region8: #{smit_classifier_forward.1} parent=1 // loop_exit
      _
    %2203 = vsyncpa [#allocation4], 1
    %s2204 = scalar_lea.sflag [#allocation4], 1
    %2205 = vsyncpa %s2204, 1

</llo_original>
